<compile_context>
chip_gen: v6e
topology: v6e:2x2x1
jax: 0.10.0
libtpu: 0.0.40
codegen_flags: <defaults>
</compile_context>

<pallas_src>
import jax
import jax.numpy as jnp
import numpy as np
from jax import lax
from jax.experimental import pallas as pl
from jax.experimental.pallas import tpu as pltpu

# ----------------------------- config -------------------------------------
SENT_EMB_DIM = 64   # self.in_dim (infersent sentence-embedding dim; small for test)
IN_EMB_DIM = 32     # in_emb_dim (GRU hidden size H)
HIDDEN_DIM = 32     # hidden_dim
L1 = 8              # number of sentences in OP's post
L2 = 8              # number of sentences in the current comment
LANES = 128

# ---- activation slab row layout (per example): (ACT_ROWS, 128) ----
#   rows 0..L2-1        : cur_sents  (lanes 0..D-1)
#   rows L2..L2+L1-1    : op_embs    (lanes 0..H-1)
#   row  2*L2           : attn       (lanes 0..L1-1)
ACT_ROWS = 24

# ---- parameter slab row layout: (P_ROWS, 128) ----
ROW_WI = 0                              # rows 0..D-1     : W_ih^T       (lanes 0..3H-1)
ROW_WH = SENT_EMB_DIM                   # rows D..D+H-1   : W_hh^T       (lanes 0..3H-1)
ROW_BX = SENT_EMB_DIM + IN_EMB_DIM      # row 96          : b_ir+b_hr | b_iz+b_hz | b_in
ROW_BHN = ROW_BX + 8                    # row 104         : 0 | 0 | b_hn
ROW_HEAD = ROW_BHN + 8                  # rows 112..      : head slab (H+5 rows, lanes 0..HID-1)
P_ROWS = ((ROW_HEAD + IN_EMB_DIM + 5 + 7) // 8) * 8        # = 152


# ----------------------------- Pallas kernel -------------------------------
def interact_kernel(act_ref, param_ref, out_ref, xp_s, cur_s):
    d, h, l1, l2, hid = SENT_EMB_DIM, IN_EMB_DIM, L1, L2, HIDDEN_DIM

    # ---- activation slices (static offsets, 8-row aligned segments) ----
    cur = act_ref[pl.ds(0, l2), pl.ds(0, d)]              # (L2, D)
    op = act_ref[pl.ds(l2, l1), pl.ds(0, h)]              # (L1, H)
    attn = act_ref[pl.ds(2 * l2, 1), pl.ds(0, l1)]        # (1, L1)

    # ---- parameter slices ----
    w_i = param_ref[pl.ds(ROW_WI, d), pl.ds(0, 3 * h)]    # (D, 3H)
    w_h = param_ref[pl.ds(ROW_WH, h), pl.ds(0, 3 * h)]    # (H, 3H)
    b_x = param_ref[pl.ds(ROW_BX, 1), pl.ds(0, 3 * h)]    # (1, 3H)
    b_hn = param_ref[pl.ds(ROW_BHN, 1), pl.ds(0, 3 * h)]  # (1, 3H) nonzero only in n slot
    w_hid_h = param_ref[pl.ds(ROW_HEAD, h), pl.ds(0, hid)]            # (H, HID)
    w_hid_max = param_ref[pl.ds(ROW_HEAD + h, 1), pl.ds(0, hid)]      # (1, HID)
    w_hid_mean = param_ref[pl.ds(ROW_HEAD + h + 1, 1), pl.ds(0, hid)]
    b_hid = param_ref[pl.ds(ROW_HEAD + h + 2, 1), pl.ds(0, hid)]
    w_pred = param_ref[pl.ds(ROW_HEAD + h + 3, 1), pl.ds(0, hid)]
    b_pred_row = param_ref[pl.ds(ROW_HEAD + h + 4, 1), pl.ds(0, hid)]  # b_pred in lane 0

    # ---- fused GRU input projection for all steps & all three gates ----
    xp_s[...] = jnp.dot(cur, w_i, preferred_element_type=jnp.float32) + b_x  # (L2, 3H)

    # ---- GRU recurrence (batch = 1), fully unrolled (L2 = 8 static) ----
    h_prev = jnp.zeros((1, h), jnp.float32)
    for t in range(l2):
        xp_t = xp_s[pl.ds(t, 1), :]                                           # (1, 3H)
        hp = jnp.dot(h_prev, w_h, preferred_element_type=jnp.float32) + b_hn  # (1, 3H)
        rz = jax.nn.sigmoid(xp_t[:, :2 * h] + hp[:, :2 * h])                  # (1, 2H)
        r = rz[:, :h]
        z = rz[:, h:]
        n = jnp.tanh(xp_t[:, 2 * h:] + r * hp[:, 2 * h:])                     # (1, H)
        h_new = (1.0 - z) * n + z * h_prev
        cur_s[pl.ds(t, 1), :] = h_new                                         # static-row store
        h_prev = h_new
    h_last = h_prev                                                           # (1, H)
    cur_embs = cur_s[...]                                                     # (L2, H)

    # ---- interaction = 'prod': cur_embs @ op_embs^T ----
    inter = lax.dot_general(cur_embs, op,
                            dimension_numbers=(((1,), (1,)), ((), ())),
                            preferred_element_type=jnp.float32)               # (L2, L1)
    attn_inter = inter * attn                                                 # (L2, L1)

    # 'max': sum over l1 of (max over l2); 'mean': mean over all l1*l2 entries
    max_s = jnp.sum(jnp.max(attn_inter, axis=0, keepdims=True),
                    axis=1, keepdims=True)                                    # (1, 1)
    mean_s = jnp.sum(jnp.sum(attn_inter, axis=0, keepdims=True),
                     axis=1, keepdims=True) * (1.0 / (l1 * l2))               # (1, 1)

    # ---- hidden_layer + predict_layer ----
    hid_pre = (jnp.dot(h_last, w_hid_h, preferred_element_type=jnp.float32)
               + max_s * w_hid_max + mean_s * w_hid_mean + b_hid)             # (1, HID)
    hid_act = jnp.maximum(hid_pre, 0.0)
    logit = jnp.sum(hid_act * w_pred + b_pred_row, axis=1, keepdims=True)     # (1, 1)
    pred = jax.nn.sigmoid(logit)                                              # (1, 1)

    # ---- single lane-dense (L2, 128) output slab ----
    row_ids = lax.broadcasted_iota(jnp.int32, (l2, 1), 0)
    pred_col = jnp.where(row_ids == 0, pred, 0.0)                             # (L2, 1)
    pad = jnp.zeros((l2, LANES - 2 * l1 - 1), jnp.float32)
    out_ref[...] = jnp.concatenate([inter, attn_inter, pred_col, pad], axis=1)


# ----------------------------- parameter packing (one-time) -----------------
def pack_params(params):
    """Pack raw PyTorch-layout parameters into ONE (P_ROWS, 128) slab. Call once
    at model load; the per-call path passes the slab straight to pallas_call."""
    w_ih, w_hh, b_ih, b_hh = params["gru"]      # (3H,D), (3H,H), (3H,), (3H,)
    w_hid, b_hid = params["hidden"]             # (HIDDEN, H+2), (HIDDEN,)
    w_pred, b_pred = params["pred"]             # (1, HIDDEN), (1,)
    h = w_hh.shape[1]
    d = w_ih.shape[1]
    hid_dim = w_hid.shape[0]
    f32 = jnp.float32

    slab = jnp.zeros((P_ROWS, LANES), f32)
    slab = slab.at[ROW_WI:ROW_WI + d, :3 * h].set(w_ih.T.astype(f32))
    slab = slab.at[ROW_WH:ROW_WH + h, :3 * h].set(w_hh.T.astype(f32))
    b_row0 = jnp.concatenate([b_ih[:2 * h] + b_hh[:2 * h], b_ih[2 * h:]]).astype(f32)
    b_row1 = jnp.concatenate([jnp.zeros((2 * h,), f32), b_hh[2 * h:].astype(f32)])
    slab = slab.at[ROW_BX, :3 * h].set(b_row0)
    slab = slab.at[ROW_BHN, :3 * h].set(b_row1)
    slab = slab.at[ROW_HEAD:ROW_HEAD + h, :hid_dim].set(w_hid[:, :h].T.astype(f32))
    slab = slab.at[ROW_HEAD + h, :hid_dim].set(w_hid[:, h].astype(f32))
    slab = slab.at[ROW_HEAD + h + 1, :hid_dim].set(w_hid[:, h + 1].astype(f32))
    slab = slab.at[ROW_HEAD + h + 2, :hid_dim].set(b_hid.astype(f32))
    slab = slab.at[ROW_HEAD + h + 3, :hid_dim].set(w_pred[0].astype(f32))
    slab = slab.at[ROW_HEAD + h + 4, 0].set(b_pred[0].astype(f32))
    return slab


# ----------------------------- wrapper --------------------------------------
@jax.jit
def interact_encoder_forward(cur_sents_b, op_embs_b, attn_weights_b, param_slab):
    """Batched Pallas-backed InteractEncoder.forward (B examples per call; B=1
    reproduces the original single-example semantics).

    Args:
      cur_sents_b:    (B, L2, D)     sentence embeddings of current comments
      op_embs_b:      (B, 1, L1, H)  encoded OP sentences
      attn_weights_b: (B, 1, L1, 1)  attention weights over OP sentences
      param_slab:     (P_ROWS, 128)  packed parameters from pack_params (once)
    Returns:
      pred (B,1,1,1), inter_emb_data (B,L2,L1,1), attn_inter_emb_data (B,L2,L1,1)
    """
    b = cur_sents_b.shape[0]
    f32 = jnp.float32

    # Pack the three per-example inputs into one lane-dense (B, 24, 128) slab.
    cur_pad = jnp.pad(cur_sents_b.astype(f32),
                      ((0, 0), (0, 0), (0, LANES - SENT_EMB_DIM)))
    op_pad = jnp.pad(op_embs_b[:, 0].astype(f32),
                     ((0, 0), (0, 0), (0, LANES - IN_EMB_DIM)))
    attn_row = attn_weights_b[:, 0, :, 0].astype(f32)[:, None, :]       # (B, 1, L1)
    attn_pad = jnp.pad(attn_row, ((0, 0), (0, 7), (0, LANES - L1)))
    act = jnp.concatenate([cur_pad, op_pad, attn_pad], axis=1)          # (B, 24, 128)

    flops_per_ex = (2 * L2 * SENT_EMB_DIM * 3 * IN_EMB_DIM    # fused input projection
                    + L2 * 2 * IN_EMB_DIM * 3 * IN_EMB_DIM    # recurrent projections
                    + 2 * L2 * L1 * IN_EMB_DIM                # interaction matmul
                    + 2 * IN_EMB_DIM * HIDDEN_DIM             # hidden head
                    + 16 * L2 * IN_EMB_DIM)                   # gate elementwise (approx)
    cost = pl.CostEstimate(
        flops=b * flops_per_ex,
        transcendentals=b * (L2 * 3 * IN_EMB_DIM + 1),
        bytes_accessed=b * (ACT_ROWS + L2) * LANES * 4 + P_ROWS * LANES * 4,
    )

    out = pl.pallas_call(
        interact_kernel,
        out_shape=jax.ShapeDtypeStruct((b, L2, LANES), f32),
        grid=(b,),
        in_specs=[
            pl.BlockSpec((None, ACT_ROWS, LANES), lambda i: (i, 0, 0)),
            # constant block index -> parameter slab DMA'd once, VMEM-resident
            pl.BlockSpec((P_ROWS, LANES), lambda i: (0, 0)),
        ],
        out_specs=pl.BlockSpec((None, L2, LANES), lambda i: (i, 0, 0)),
        scratch_shapes=[
            pltpu.VMEM((L2, 3 * IN_EMB_DIM), f32),   # staged GRU input projection
            pltpu.VMEM((L2, IN_EMB_DIM), f32),       # GRU output sequence
        ],
        compiler_params=pltpu.CompilerParams(dimension_semantics=("parallel",)),
        cost_estimate=cost,
    )(act, param_slab)

    inter = out[:, :, :L1, None]                       # (B, L2, L1, 1)
    attn_inter = out[:, :, L1:2 * L1, None]            # (B, L2, L1, 1)
    pred = out[:, 0, 2 * L1].reshape(b, 1, 1, 1)
    return pred, inter, attn_inter


# ----------------------------- plain-JAX reference --------------------------
def reference_forward(cur_sents, op_embs, attn_weights, params):
    w_ih, w_hh, b_ih, b_hh = params["gru"]
    w_hid, b_hid = params["hidden"]
    w_pred, b_pred = params["pred"]
    h_dim = w_hh.shape[1]

    def gru_cell(h, x):
        gi = x @ w_ih.T + b_ih
        gh = h @ w_hh.T + b_hh
        i_r, i_z, i_n = jnp.split(gi, 3)
        h_r, h_z, h_n = jnp.split(gh, 3)
        r = jax.nn.sigmoid(i_r + h_r)
        z = jax.nn.sigmoid(i_z + h_z)
        n = jnp.tanh(i_n + r * h_n)
        h_new = (1.0 - z) * n + z * h
        return h_new, h_new

    h0 = jnp.zeros((h_dim,), jnp.float32)
    h_last, embs = lax.scan(gru_cell, h0, cur_sents)        # (H,), (L2, H)

    op = op_embs[0]                                         # (L1, H)
    attn = attn_weights[0, :, 0]                            # (L1,)
    inter = embs @ op.T                                     # (L2, L1)
    attn_inter = inter * attn[None, :]
    max_s = jnp.sum(jnp.max(attn_inter, axis=0))
    mean_s = jnp.mean(attn_inter)

    hidden_in = jnp.concatenate([h_last, max_s[None], mean_s[None]])
    hid = jax.nn.relu(hidden_in @ w_hid.T + b_hid)
    pred = jax.nn.sigmoid(hid @ w_pred.T + b_pred)
    return pred.reshape(1, 1, 1), inter[..., None], attn_inter[..., None]


# ----------------------------- main -----------------------------------------
if __name__ == "__main__":
    D, H, HID = SENT_EMB_DIM, IN_EMB_DIM, HIDDEN_DIM
    B = 4
    key = jax.random.PRNGKey(0)
    ks = jax.random.split(key, 12)
    bound = 1.0 / np.sqrt(H)

    params = {
        "gru": (
            jax.random.uniform(ks[0], (3 * H, D), jnp.float32, -bound, bound),
            jax.random.uniform(ks[1], (3 * H, H), jnp.float32, -bound, bound),
            jax.random.uniform(ks[2], (3 * H,), jnp.float32, -bound, bound),
            jax.random.uniform(ks[3], (3 * H,), jnp.float32, -bound, bound),
        ),
        # hidden_layer: Linear(H + 2 -> HIDDEN) for hidden_comb = [cur, max, mean]
        "hidden": (
            jax.random.uniform(ks[4], (HID, H + 2), jnp.float32, -bound, bound),
            jax.random.uniform(ks[5], (HID,), jnp.float32, -bound, bound),
        ),
        # predict_layer: Linear(HIDDEN -> 1) + Sigmoid
        "pred": (
            jax.random.uniform(ks[6], (1, HID), jnp.float32, -bound, bound),
            jax.random.uniform(ks[7], (1,), jnp.float32, -bound, bound),
        ),
    }

    # Batched inputs (infersent path: sentence embeddings provided directly;
    # dropout in eval mode -> identity).
    cur_sents_b = jax.random.normal(ks[8], (B, L2, D), jnp.float32)
    op_embs_b = jnp.tanh(jax.random.normal(ks[9], (B, 1, L1, H), jnp.float32))
    attn_weights_b = jax.nn.softmax(
        jax.random.normal(ks[10], (B, 1, L1, 1), jnp.float32), axis=2)

    # TODO(synk): 'glove' path (embedding-table lookup + ragged per-sentence sum),
    #             tfidf/wdsim feature branches, non-'prod' interaction MLP and
    #             training-mode dropout are not part of the chosen configuration
    #             and are not implemented.

    # One-time parameter packing (hoisted out of the per-call path).
    param_slab = jax.block_until_ready(pack_params(params))

    pred, inter, attn_inter = interact_encoder_forward(
        cur_sents_b, op_embs_b, attn_weights_b, param_slab)
    jax.block_until_ready((pred, inter, attn_inter))

    for i in range(B):
        ref_pred, ref_inter, ref_attn_inter = reference_forward(
            cur_sents_b[i], op_embs_b[i], attn_weights_b[i], params)
        np.testing.assert_allclose(np.asarray(pred[i]), np.asarray(ref_pred),
                                   rtol=1e-2, atol=1e-4)
        np.testing.assert_allclose(np.asarray(inter[i]), np.asarray(ref_inter),
                                   rtol=1e-2, atol=1e-4)
        np.testing.assert_allclose(np.asarray(attn_inter[i]),
                                   np.asarray(ref_attn_inter),
                                   rtol=1e-2, atol=1e-4)

    print("KERNEL_OK")
</pallas_src>

<mosaic_0001>
module attributes {stable_mosaic.version = 11 : i64} {
  func.func @interact_kernel(%arg0: i32, %arg1: memref<1x24x128xf32, #tpu.memory_space<vmem>>, %arg2: memref<152x128xf32, #tpu.memory_space<vmem>>, %arg3: memref<1x8x128xf32, #tpu.memory_space<vmem>>, %arg4: memref<8x96xf32, #tpu.memory_space<vmem>>, %arg5: memref<8x32xf32, #tpu.memory_space<vmem>>) attributes {dimension_semantics = [#tpu.dimension_semantics<parallel>], iteration_bounds = array<i64: 4>, scalar_prefetch = 0 : i64, scratch_operands = 2 : i64, tpu.core_type = #tpu.core_type<tc>, window_params = [{transform_indices = @transform_0, window_bounds = array<i64: 1, 24, 128>}, {pipeline_mode = #tpu.pipeline_mode<synchronous>, transform_indices = @transform_1, window_bounds = array<i64: 152, 128>}, {transform_indices = @transform_2, window_bounds = array<i64: 1, 8, 128>}]} {
    %c0 = arith.constant 0 : index
    %c0_0 = arith.constant 0 : index
    %c0_1 = arith.constant 0 : index
    %0 = vector.load %arg1[%c0, %c0_0, %c0_1] : memref<1x24x128xf32, #tpu.memory_space<vmem>>, vector<1x8x64xf32>
    %1 = vector.shape_cast %0 : vector<1x8x64xf32> to vector<8x64xf32>
    %c0_2 = arith.constant 0 : index
    %c8 = arith.constant 8 : index
    %c0_3 = arith.constant 0 : index
    %2 = vector.load %arg1[%c0_2, %c8, %c0_3] : memref<1x24x128xf32, #tpu.memory_space<vmem>>, vector<1x8x32xf32>
    %3 = vector.shape_cast %2 : vector<1x8x32xf32> to vector<8x32xf32>
    %c0_4 = arith.constant 0 : index
    %c16 = arith.constant 16 : index
    %c0_5 = arith.constant 0 : index
    %4 = vector.load %arg1[%c0_4, %c16, %c0_5] : memref<1x24x128xf32, #tpu.memory_space<vmem>>, vector<1x1x8xf32>
    %5 = vector.shape_cast %4 : vector<1x1x8xf32> to vector<1x8xf32>
    %c0_6 = arith.constant 0 : index
    %c0_7 = arith.constant 0 : index
    %6 = vector.load %arg2[%c0_6, %c0_7] : memref<152x128xf32, #tpu.memory_space<vmem>>, vector<64x96xf32>
    %c64 = arith.constant 64 : index
    %c0_8 = arith.constant 0 : index
    %7 = vector.load %arg2[%c64, %c0_8] : memref<152x128xf32, #tpu.memory_space<vmem>>, vector<32x96xf32>
    %c96 = arith.constant 96 : index
    %c0_9 = arith.constant 0 : index
    %8 = vector.load %arg2[%c96, %c0_9] : memref<152x128xf32, #tpu.memory_space<vmem>>, vector<1x96xf32>
    %c104 = arith.constant 104 : index
    %c0_10 = arith.constant 0 : index
    %9 = vector.load %arg2[%c104, %c0_10] : memref<152x128xf32, #tpu.memory_space<vmem>>, vector<1x96xf32>
    %c112 = arith.constant 112 : index
    %c0_11 = arith.constant 0 : index
    %10 = vector.load %arg2[%c112, %c0_11] : memref<152x128xf32, #tpu.memory_space<vmem>>, vector<32x32xf32>
    %c144 = arith.constant 144 : index
    %c0_12 = arith.constant 0 : index
    %11 = vector.load %arg2[%c144, %c0_12] : memref<152x128xf32, #tpu.memory_space<vmem>>, vector<1x32xf32>
    %c145 = arith.constant 145 : index
    %c0_13 = arith.constant 0 : index
    %12 = vector.load %arg2[%c145, %c0_13] : memref<152x128xf32, #tpu.memory_space<vmem>>, vector<1x32xf32>
    %c146 = arith.constant 146 : index
    %c0_14 = arith.constant 0 : index
    %13 = vector.load %arg2[%c146, %c0_14] : memref<152x128xf32, #tpu.memory_space<vmem>>, vector<1x32xf32>
    %c147 = arith.constant 147 : index
    %c0_15 = arith.constant 0 : index
    %14 = vector.load %arg2[%c147, %c0_15] : memref<152x128xf32, #tpu.memory_space<vmem>>, vector<1x32xf32>
    %c148 = arith.constant 148 : index
    %c0_16 = arith.constant 0 : index
    %15 = vector.load %arg2[%c148, %c0_16] : memref<152x128xf32, #tpu.memory_space<vmem>>, vector<1x32xf32>
    %cst = arith.constant dense<0.000000e+00> : vector<8x96xf32>
    %16 = tpu.matmul %1, %6, %cst {dimension_numbers = #tpu.dot_dimension_numbers<[1], [0], [0], [1], [0, 0, 1, 1], [], []>} : vector<8x64xf32>, vector<64x96xf32>, vector<8x96xf32> -> vector<8x96xf32>
    %17 = vector.broadcast %8 : vector<1x96xf32> to vector<8x96xf32>
    %18 = arith.addf %16, %17 : vector<8x96xf32>
    %c0_17 = arith.constant 0 : index
    %c0_18 = arith.constant 0 : index
    %19 = vector.load %arg4[%c0_17, %c0_18] : memref<8x96xf32, #tpu.memory_space<vmem>>, vector<8x96xf32>
    tpu.vector_store %arg4[%c0_17, %c0_18], %18 {strides = array<i32>} : memref<8x96xf32, #tpu.memory_space<vmem>>, vector<8x96xf32>,
    %cst_19 = arith.constant 0.000000e+00 : f32
    %20 = vector.broadcast %cst_19 : f32 to vector<1x32xf32>
    %c0_20 = arith.constant 0 : index
    %c0_21 = arith.constant 0 : index
    %21 = vector.load %arg4[%c0_20, %c0_21] : memref<8x96xf32, #tpu.memory_space<vmem>>, vector<1x96xf32>
    %cst_22 = arith.constant dense<0.000000e+00> : vector<1x96xf32>
    %22 = tpu.matmul %20, %7, %cst_22 {dimension_numbers = #tpu.dot_dimension_numbers<[1], [0], [0], [1], [0, 0, 1, 1], [], []>} : vector<1x32xf32>, vector<32x96xf32>, vector<1x96xf32> -> vector<1x96xf32>
    %23 = arith.addf %22, %9 : vector<1x96xf32>
    %24 = vector.extract_strided_slice %21 {offsets = [0, 0], sizes = [1, 64], strides = [1, 1]} : vector<1x96xf32> to vector<1x64xf32>
    %25 = vector.extract_strided_slice %23 {offsets = [0, 0], sizes = [1, 64], strides = [1, 1]} : vector<1x96xf32> to vector<1x64xf32>
    %26 = arith.addf %24, %25 : vector<1x64xf32>
    %27 = arith.negf %26 : vector<1x64xf32>
    %28 = math.exp %27 : vector<1x64xf32>
    %cst_23 = arith.constant 1.000000e+00 : f32
    %29 = vector.broadcast %cst_23 : f32 to vector<1x64xf32>
    %30 = arith.addf %29, %28 : vector<1x64xf32>
    %31 = arith.divf %29, %30 : vector<1x64xf32>
    %32 = vector.extract_strided_slice %31 {offsets = [0, 0], sizes = [1, 32], strides = [1, 1]} : vector<1x64xf32> to vector<1x32xf32>
    %33 = vector.extract_strided_slice %31 {offsets = [0, 32], sizes = [1, 32], strides = [1, 1]} : vector<1x64xf32> to vector<1x32xf32>
    %34 = vector.extract_strided_slice %21 {offsets = [0, 64], sizes = [1, 32], strides = [1, 1]} : vector<1x96xf32> to vector<1x32xf32>
    %35 = vector.extract_strided_slice %23 {offsets = [0, 64], sizes = [1, 32], strides = [1, 1]} : vector<1x96xf32> to vector<1x32xf32>
    %36 = arith.mulf %32, %35 : vector<1x32xf32>
    %37 = arith.addf %34, %36 : vector<1x32xf32>
    %38 = math.tanh %37 : vector<1x32xf32>
    %cst_24 = arith.constant 1.000000e+00 : f32
    %39 = vector.broadcast %cst_24 : f32 to vector<1x32xf32>
    %40 = arith.subf %39, %33 : vector<1x32xf32>
    %41 = arith.mulf %40, %38 : vector<1x32xf32>
    %42 = arith.mulf %33, %20 : vector<1x32xf32>
    %43 = arith.addf %41, %42 : vector<1x32xf32>
    %c0_25 = arith.constant 0 : index
    %c0_26 = arith.constant 0 : index
    %44 = vector.load %arg5[%c0_25, %c0_26] : memref<8x32xf32, #tpu.memory_space<vmem>>, vector<1x32xf32>
    tpu.vector_store %arg5[%c0_25, %c0_26], %43 {strides = array<i32>} : memref<8x32xf32, #tpu.memory_space<vmem>>, vector<1x32xf32>,
    %c1 = arith.constant 1 : index
    %c0_27 = arith.constant 0 : index
    %45 = vector.load %arg4[%c1, %c0_27] : memref<8x96xf32, #tpu.memory_space<vmem>>, vector<1x96xf32>
    %cst_28 = arith.constant dense<0.000000e+00> : vector<1x96xf32>
    %46 = tpu.matmul %43, %7, %cst_28 {dimension_numbers = #tpu.dot_dimension_numbers<[1], [0], [0], [1], [0, 0, 1, 1], [], []>} : vector<1x32xf32>, vector<32x96xf32>, vector<1x96xf32> -> vector<1x96xf32>
    %47 = arith.addf %46, %9 : vector<1x96xf32>
    %48 = vector.extract_strided_slice %45 {offsets = [0, 0], sizes = [1, 64], strides = [1, 1]} : vector<1x96xf32> to vector<1x64xf32>
    %49 = vector.extract_strided_slice %47 {offsets = [0, 0], sizes = [1, 64], strides = [1, 1]} : vector<1x96xf32> to vector<1x64xf32>
    %50 = arith.addf %48, %49 : vector<1x64xf32>
    %51 = arith.negf %50 : vector<1x64xf32>
    %52 = math.exp %51 : vector<1x64xf32>
    %cst_29 = arith.constant 1.000000e+00 : f32
    %53 = vector.broadcast %cst_29 : f32 to vector<1x64xf32>
    %54 = arith.addf %53, %52 : vector<1x64xf32>
    %55 = arith.divf %53, %54 : vector<1x64xf32>
    %56 = vector.extract_strided_slice %55 {offsets = [0, 0], sizes = [1, 32], strides = [1, 1]} : vector<1x64xf32> to vector<1x32xf32>
    %57 = vector.extract_strided_slice %55 {offsets = [0, 32], sizes = [1, 32], strides = [1, 1]} : vector<1x64xf32> to vector<1x32xf32>
    %58 = vector.extract_strided_slice %45 {offsets = [0, 64], sizes = [1, 32], strides = [1, 1]} : vector<1x96xf32> to vector<1x32xf32>
    %59 = vector.extract_strided_slice %47 {offsets = [0, 64], sizes = [1, 32], strides = [1, 1]} : vector<1x96xf32> to vector<1x32xf32>
    %60 = arith.mulf %56, %59 : vector<1x32xf32>
    %61 = arith.addf %58, %60 : vector<1x32xf32>
    %62 = math.tanh %61 : vector<1x32xf32>
    %cst_30 = arith.constant 1.000000e+00 : f32
    %63 = vector.broadcast %cst_30 : f32 to vector<1x32xf32>
    %64 = arith.subf %63, %57 : vector<1x32xf32>
    %65 = arith.mulf %64, %62 : vector<1x32xf32>
    %66 = arith.mulf %57, %43 : vector<1x32xf32>
    %67 = arith.addf %65, %66 : vector<1x32xf32>
    %c1_31 = arith.constant 1 : index
    %c0_32 = arith.constant 0 : index
    %68 = vector.load %arg5[%c1_31, %c0_32] : memref<8x32xf32, #tpu.memory_space<vmem>>, vector<1x32xf32>
    tpu.vector_store %arg5[%c1_31, %c0_32], %67 {strides = array<i32>} : memref<8x32xf32, #tpu.memory_space<vmem>>, vector<1x32xf32>,
    %c2 = arith.constant 2 : index
    %c0_33 = arith.constant 0 : index
    %69 = vector.load %arg4[%c2, %c0_33] : memref<8x96xf32, #tpu.memory_space<vmem>>, vector<1x96xf32>
    %cst_34 = arith.constant dense<0.000000e+00> : vector<1x96xf32>
    %70 = tpu.matmul %67, %7, %cst_34 {dimension_numbers = #tpu.dot_dimension_numbers<[1], [0], [0], [1], [0, 0, 1, 1], [], []>} : vector<1x32xf32>, vector<32x96xf32>, vector<1x96xf32> -> vector<1x96xf32>
    %71 = arith.addf %70, %9 : vector<1x96xf32>
    %72 = vector.extract_strided_slice %69 {offsets = [0, 0], sizes = [1, 64], strides = [1, 1]} : vector<1x96xf32> to vector<1x64xf32>
    %73 = vector.extract_strided_slice %71 {offsets = [0, 0], sizes = [1, 64], strides = [1, 1]} : vector<1x96xf32> to vector<1x64xf32>
    %74 = arith.addf %72, %73 : vector<1x64xf32>
    %75 = arith.negf %74 : vector<1x64xf32>
    %76 = math.exp %75 : vector<1x64xf32>
    %cst_35 = arith.constant 1.000000e+00 : f32
    %77 = vector.broadcast %cst_35 : f32 to vector<1x64xf32>
    %78 = arith.addf %77, %76 : vector<1x64xf32>
    %79 = arith.divf %77, %78 : vector<1x64xf32>
    %80 = vector.extract_strided_slice %79 {offsets = [0, 0], sizes = [1, 32], strides = [1, 1]} : vector<1x64xf32> to vector<1x32xf32>
    %81 = vector.extract_strided_slice %79 {offsets = [0, 32], sizes = [1, 32], strides = [1, 1]} : vector<1x64xf32> to vector<1x32xf32>
    %82 = vector.extract_strided_slice %69 {offsets = [0, 64], sizes = [1, 32], strides = [1, 1]} : vector<1x96xf32> to vector<1x32xf32>
    %83 = vector.extract_strided_slice %71 {offsets = [0, 64], sizes = [1, 32], strides = [1, 1]} : vector<1x96xf32> to vector<1x32xf32>
    %84 = arith.mulf %80, %83 : vector<1x32xf32>
    %85 = arith.addf %82, %84 : vector<1x32xf32>
    %86 = math.tanh %85 : vector<1x32xf32>
    %cst_36 = arith.constant 1.000000e+00 : f32
    %87 = vector.broadcast %cst_36 : f32 to vector<1x32xf32>
    %88 = arith.subf %87, %81 : vector<1x32xf32>
    %89 = arith.mulf %88, %86 : vector<1x32xf32>
    %90 = arith.mulf %81, %67 : vector<1x32xf32>
    %91 = arith.addf %89, %90 : vector<1x32xf32>
    %c2_37 = arith.constant 2 : index
    %c0_38 = arith.constant 0 : index
    %92 = vector.load %arg5[%c2_37, %c0_38] : memref<8x32xf32, #tpu.memory_space<vmem>>, vector<1x32xf32>
    tpu.vector_store %arg5[%c2_37, %c0_38], %91 {strides = array<i32>} : memref<8x32xf32, #tpu.memory_space<vmem>>, vector<1x32xf32>,
    %c3 = arith.constant 3 : index
    %c0_39 = arith.constant 0 : index
    %93 = vector.load %arg4[%c3, %c0_39] : memref<8x96xf32, #tpu.memory_space<vmem>>, vector<1x96xf32>
    %cst_40 = arith.constant dense<0.000000e+00> : vector<1x96xf32>
    %94 = tpu.matmul %91, %7, %cst_40 {dimension_numbers = #tpu.dot_dimension_numbers<[1], [0], [0], [1], [0, 0, 1, 1], [], []>} : vector<1x32xf32>, vector<32x96xf32>, vector<1x96xf32> -> vector<1x96xf32>
    %95 = arith.addf %94, %9 : vector<1x96xf32>
    %96 = vector.extract_strided_slice %93 {offsets = [0, 0], sizes = [1, 64], strides = [1, 1]} : vector<1x96xf32> to vector<1x64xf32>
    %97 = vector.extract_strided_slice %95 {offsets = [0, 0], sizes = [1, 64], strides = [1, 1]} : vector<1x96xf32> to vector<1x64xf32>
    %98 = arith.addf %96, %97 : vector<1x64xf32>
    %99 = arith.negf %98 : vector<1x64xf32>
    %100 = math.exp %99 : vector<1x64xf32>
    %cst_41 = arith.constant 1.000000e+00 : f32
    %101 = vector.broadcast %cst_41 : f32 to vector<1x64xf32>
    %102 = arith.addf %101, %100 : vector<1x64xf32>
    %103 = arith.divf %101, %102 : vector<1x64xf32>
    %104 = vector.extract_strided_slice %103 {offsets = [0, 0], sizes = [1, 32], strides = [1, 1]} : vector<1x64xf32> to vector<1x32xf32>
    %105 = vector.extract_strided_slice %103 {offsets = [0, 32], sizes = [1, 32], strides = [1, 1]} : vector<1x64xf32> to vector<1x32xf32>
    %106 = vector.extract_strided_slice %93 {offsets = [0, 64], sizes = [1, 32], strides = [1, 1]} : vector<1x96xf32> to vector<1x32xf32>
    %107 = vector.extract_strided_slice %95 {offsets = [0, 64], sizes = [1, 32], strides = [1, 1]} : vector<1x96xf32> to vector<1x32xf32>
    %108 = arith.mulf %104, %107 : vector<1x32xf32>
    %109 = arith.addf %106, %108 : vector<1x32xf32>
    %110 = math.tanh %109 : vector<1x32xf32>
    %cst_42 = arith.constant 1.000000e+00 : f32
    %111 = vector.broadcast %cst_42 : f32 to vector<1x32xf32>
    %112 = arith.subf %111, %105 : vector<1x32xf32>
    %113 = arith.mulf %112, %110 : vector<1x32xf32>
    %114 = arith.mulf %105, %91 : vector<1x32xf32>
    %115 = arith.addf %113, %114 : vector<1x32xf32>
    %c3_43 = arith.constant 3 : index
    %c0_44 = arith.constant 0 : index
    %116 = vector.load %arg5[%c3_43, %c0_44] : memref<8x32xf32, #tpu.memory_space<vmem>>, vector<1x32xf32>
    tpu.vector_store %arg5[%c3_43, %c0_44], %115 {strides = array<i32>} : memref<8x32xf32, #tpu.memory_space<vmem>>, vector<1x32xf32>,
    %c4 = arith.constant 4 : index
    %c0_45 = arith.constant 0 : index
    %117 = vector.load %arg4[%c4, %c0_45] : memref<8x96xf32, #tpu.memory_space<vmem>>, vector<1x96xf32>
    %cst_46 = arith.constant dense<0.000000e+00> : vector<1x96xf32>
    %118 = tpu.matmul %115, %7, %cst_46 {dimension_numbers = #tpu.dot_dimension_numbers<[1], [0], [0], [1], [0, 0, 1, 1], [], []>} : vector<1x32xf32>, vector<32x96xf32>, vector<1x96xf32> -> vector<1x96xf32>
    %119 = arith.addf %118, %9 : vector<1x96xf32>
    %120 = vector.extract_strided_slice %117 {offsets = [0, 0], sizes = [1, 64], strides = [1, 1]} : vector<1x96xf32> to vector<1x64xf32>
    %121 = vector.extract_strided_slice %119 {offsets = [0, 0], sizes = [1, 64], strides = [1, 1]} : vector<1x96xf32> to vector<1x64xf32>
    %122 = arith.addf %120, %121 : vector<1x64xf32>
    %123 = arith.negf %122 : vector<1x64xf32>
    %124 = math.exp %123 : vector<1x64xf32>
    %cst_47 = arith.constant 1.000000e+00 : f32
    %125 = vector.broadcast %cst_47 : f32 to vector<1x64xf32>
    %126 = arith.addf %125, %124 : vector<1x64xf32>
    %127 = arith.divf %125, %126 : vector<1x64xf32>
    %128 = vector.extract_strided_slice %127 {offsets = [0, 0], sizes = [1, 32], strides = [1, 1]} : vector<1x64xf32> to vector<1x32xf32>
    %129 = vector.extract_strided_slice %127 {offsets = [0, 32], sizes = [1, 32], strides = [1, 1]} : vector<1x64xf32> to vector<1x32xf32>
    %130 = vector.extract_strided_slice %117 {offsets = [0, 64], sizes = [1, 32], strides = [1, 1]} : vector<1x96xf32> to vector<1x32xf32>
    %131 = vector.extract_strided_slice %119 {offsets = [0, 64], sizes = [1, 32], strides = [1, 1]} : vector<1x96xf32> to vector<1x32xf32>
    %132 = arith.mulf %128, %131 : vector<1x32xf32>
    %133 = arith.addf %130, %132 : vector<1x32xf32>
    %134 = math.tanh %133 : vector<1x32xf32>
    %cst_48 = arith.constant 1.000000e+00 : f32
    %135 = vector.broadcast %cst_48 : f32 to vector<1x32xf32>
    %136 = arith.subf %135, %129 : vector<1x32xf32>
    %137 = arith.mulf %136, %134 : vector<1x32xf32>
    %138 = arith.mulf %129, %115 : vector<1x32xf32>
    %139 = arith.addf %137, %138 : vector<1x32xf32>
    %c4_49 = arith.constant 4 : index
    %c0_50 = arith.constant 0 : index
    %140 = vector.load %arg5[%c4_49, %c0_50] : memref<8x32xf32, #tpu.memory_space<vmem>>, vector<1x32xf32>
    tpu.vector_store %arg5[%c4_49, %c0_50], %139 {strides = array<i32>} : memref<8x32xf32, #tpu.memory_space<vmem>>, vector<1x32xf32>,
    %c5 = arith.constant 5 : index
    %c0_51 = arith.constant 0 : index
    %141 = vector.load %arg4[%c5, %c0_51] : memref<8x96xf32, #tpu.memory_space<vmem>>, vector<1x96xf32>
    %cst_52 = arith.constant dense<0.000000e+00> : vector<1x96xf32>
    %142 = tpu.matmul %139, %7, %cst_52 {dimension_numbers = #tpu.dot_dimension_numbers<[1], [0], [0], [1], [0, 0, 1, 1], [], []>} : vector<1x32xf32>, vector<32x96xf32>, vector<1x96xf32> -> vector<1x96xf32>
    %143 = arith.addf %142, %9 : vector<1x96xf32>
    %144 = vector.extract_strided_slice %141 {offsets = [0, 0], sizes = [1, 64], strides = [1, 1]} : vector<1x96xf32> to vector<1x64xf32>
    %145 = vector.extract_strided_slice %143 {offsets = [0, 0], sizes = [1, 64], strides = [1, 1]} : vector<1x96xf32> to vector<1x64xf32>
    %146 = arith.addf %144, %145 : vector<1x64xf32>
    %147 = arith.negf %146 : vector<1x64xf32>
    %148 = math.exp %147 : vector<1x64xf32>
    %cst_53 = arith.constant 1.000000e+00 : f32
    %149 = vector.broadcast %cst_53 : f32 to vector<1x64xf32>
    %150 = arith.addf %149, %148 : vector<1x64xf32>
    %151 = arith.divf %149, %150 : vector<1x64xf32>
    %152 = vector.extract_strided_slice %151 {offsets = [0, 0], sizes = [1, 32], strides = [1, 1]} : vector<1x64xf32> to vector<1x32xf32>
    %153 = vector.extract_strided_slice %151 {offsets = [0, 32], sizes = [1, 32], strides = [1, 1]} : vector<1x64xf32> to vector<1x32xf32>
    %154 = vector.extract_strided_slice %141 {offsets = [0, 64], sizes = [1, 32], strides = [1, 1]} : vector<1x96xf32> to vector<1x32xf32>
    %155 = vector.extract_strided_slice %143 {offsets = [0, 64], sizes = [1, 32], strides = [1, 1]} : vector<1x96xf32> to vector<1x32xf32>
    %156 = arith.mulf %152, %155 : vector<1x32xf32>
    %157 = arith.addf %154, %156 : vector<1x32xf32>
    %158 = math.tanh %157 : vector<1x32xf32>
    %cst_54 = arith.constant 1.000000e+00 : f32
    %159 = vector.broadcast %cst_54 : f32 to vector<1x32xf32>
    %160 = arith.subf %159, %153 : vector<1x32xf32>
    %161 = arith.mulf %160, %158 : vector<1x32xf32>
    %162 = arith.mulf %153, %139 : vector<1x32xf32>
    %163 = arith.addf %161, %162 : vector<1x32xf32>
    %c5_55 = arith.constant 5 : index
    %c0_56 = arith.constant 0 : index
    %164 = vector.load %arg5[%c5_55, %c0_56] : memref<8x32xf32, #tpu.memory_space<vmem>>, vector<1x32xf32>
    tpu.vector_store %arg5[%c5_55, %c0_56], %163 {strides = array<i32>} : memref<8x32xf32, #tpu.memory_space<vmem>>, vector<1x32xf32>,
    %c6 = arith.constant 6 : index
    %c0_57 = arith.constant 0 : index
    %165 = vector.load %arg4[%c6, %c0_57] : memref<8x96xf32, #tpu.memory_space<vmem>>, vector<1x96xf32>
    %cst_58 = arith.constant dense<0.000000e+00> : vector<1x96xf32>
    %166 = tpu.matmul %163, %7, %cst_58 {dimension_numbers = #tpu.dot_dimension_numbers<[1], [0], [0], [1], [0, 0, 1, 1], [], []>} : vector<1x32xf32>, vector<32x96xf32>, vector<1x96xf32> -> vector<1x96xf32>
    %167 = arith.addf %166, %9 : vector<1x96xf32>
    %168 = vector.extract_strided_slice %165 {offsets = [0, 0], sizes = [1, 64], strides = [1, 1]} : vector<1x96xf32> to vector<1x64xf32>
    %169 = vector.extract_strided_slice %167 {offsets = [0, 0], sizes = [1, 64], strides = [1, 1]} : vector<1x96xf32> to vector<1x64xf32>
    %170 = arith.addf %168, %169 : vector<1x64xf32>
    %171 = arith.negf %170 : vector<1x64xf32>
    %172 = math.exp %171 : vector<1x64xf32>
    %cst_59 = arith.constant 1.000000e+00 : f32
    %173 = vector.broadcast %cst_59 : f32 to vector<1x64xf32>
    %174 = arith.addf %173, %172 : vector<1x64xf32>
    %175 = arith.divf %173, %174 : vector<1x64xf32>
    %176 = vector.extract_strided_slice %175 {offsets = [0, 0], sizes = [1, 32], strides = [1, 1]} : vector<1x64xf32> to vector<1x32xf32>
    %177 = vector.extract_strided_slice %175 {offsets = [0, 32], sizes = [1, 32], strides = [1, 1]} : vector<1x64xf32> to vector<1x32xf32>
    %178 = vector.extract_strided_slice %165 {offsets = [0, 64], sizes = [1, 32], strides = [1, 1]} : vector<1x96xf32> to vector<1x32xf32>
    %179 = vector.extract_strided_slice %167 {offsets = [0, 64], sizes = [1, 32], strides = [1, 1]} : vector<1x96xf32> to vector<1x32xf32>
    %180 = arith.mulf %176, %179 : vector<1x32xf32>
    %181 = arith.addf %178, %180 : vector<1x32xf32>
    %182 = math.tanh %181 : vector<1x32xf32>
    %cst_60 = arith.constant 1.000000e+00 : f32
    %183 = vector.broadcast %cst_60 : f32 to vector<1x32xf32>
    %184 = arith.subf %183, %177 : vector<1x32xf32>
    %185 = arith.mulf %184, %182 : vector<1x32xf32>
    %186 = arith.mulf %177, %163 : vector<1x32xf32>
    %187 = arith.addf %185, %186 : vector<1x32xf32>
    %c6_61 = arith.constant 6 : index
    %c0_62 = arith.constant 0 : index
    %188 = vector.load %arg5[%c6_61, %c0_62] : memref<8x32xf32, #tpu.memory_space<vmem>>, vector<1x32xf32>
    tpu.vector_store %arg5[%c6_61, %c0_62], %187 {strides = array<i32>} : memref<8x32xf32, #tpu.memory_space<vmem>>, vector<1x32xf32>,
    %c7 = arith.constant 7 : index
    %c0_63 = arith.constant 0 : index
    %189 = vector.load %arg4[%c7, %c0_63] : memref<8x96xf32, #tpu.memory_space<vmem>>, vector<1x96xf32>
    %cst_64 = arith.constant dense<0.000000e+00> : vector<1x96xf32>
    %190 = tpu.matmul %187, %7, %cst_64 {dimension_numbers = #tpu.dot_dimension_numbers<[1], [0], [0], [1], [0, 0, 1, 1], [], []>} : vector<1x32xf32>, vector<32x96xf32>, vector<1x96xf32> -> vector<1x96xf32>
    %191 = arith.addf %190, %9 : vector<1x96xf32>
    %192 = vector.extract_strided_slice %189 {offsets = [0, 0], sizes = [1, 64], strides = [1, 1]} : vector<1x96xf32> to vector<1x64xf32>
    %193 = vector.extract_strided_slice %191 {offsets = [0, 0], sizes = [1, 64], strides = [1, 1]} : vector<1x96xf32> to vector<1x64xf32>
    %194 = arith.addf %192, %193 : vector<1x64xf32>
    %195 = arith.negf %194 : vector<1x64xf32>
    %196 = math.exp %195 : vector<1x64xf32>
    %cst_65 = arith.constant 1.000000e+00 : f32
    %197 = vector.broadcast %cst_65 : f32 to vector<1x64xf32>
    %198 = arith.addf %197, %196 : vector<1x64xf32>
    %199 = arith.divf %197, %198 : vector<1x64xf32>
    %200 = vector.extract_strided_slice %199 {offsets = [0, 0], sizes = [1, 32], strides = [1, 1]} : vector<1x64xf32> to vector<1x32xf32>
    %201 = vector.extract_strided_slice %199 {offsets = [0, 32], sizes = [1, 32], strides = [1, 1]} : vector<1x64xf32> to vector<1x32xf32>
    %202 = vector.extract_strided_slice %189 {offsets = [0, 64], sizes = [1, 32], strides = [1, 1]} : vector<1x96xf32> to vector<1x32xf32>
    %203 = vector.extract_strided_slice %191 {offsets = [0, 64], sizes = [1, 32], strides = [1, 1]} : vector<1x96xf32> to vector<1x32xf32>
    %204 = arith.mulf %200, %203 : vector<1x32xf32>
    %205 = arith.addf %202, %204 : vector<1x32xf32>
    %206 = math.tanh %205 : vector<1x32xf32>
    %cst_66 = arith.constant 1.000000e+00 : f32
    %207 = vector.broadcast %cst_66 : f32 to vector<1x32xf32>
    %208 = arith.subf %207, %201 : vector<1x32xf32>
    %209 = arith.mulf %208, %206 : vector<1x32xf32>
    %210 = arith.mulf %201, %187 : vector<1x32xf32>
    %211 = arith.addf %209, %210 : vector<1x32xf32>
    %c7_67 = arith.constant 7 : index
    %c0_68 = arith.constant 0 : index
    %212 = vector.load %arg5[%c7_67, %c0_68] : memref<8x32xf32, #tpu.memory_space<vmem>>, vector<1x32xf32>
    tpu.vector_store %arg5[%c7_67, %c0_68], %211 {strides = array<i32>} : memref<8x32xf32, #tpu.memory_space<vmem>>, vector<1x32xf32>,
    %c0_69 = arith.constant 0 : index
    %c0_70 = arith.constant 0 : index
    %213 = vector.load %arg5[%c0_69, %c0_70] : memref<8x32xf32, #tpu.memory_space<vmem>>, vector<8x32xf32>
    %cst_71 = arith.constant dense<0.000000e+00> : vector<8x8xf32>
    %214 = tpu.matmul %213, %3, %cst_71 {dimension_numbers = #tpu.dot_dimension_numbers<[1], [1], [0], [0], [0, 0, 1, 0], [], []>} : vector<8x32xf32>, vector<8x32xf32>, vector<8x8xf32> -> vector<8x8xf32>
    %215 = vector.broadcast %5 : vector<1x8xf32> to vector<8x8xf32>
    %216 = arith.mulf %214, %215 : vector<8x8xf32>
    %cst_72 = arith.constant dense<0xFF800000> : vector<8xf32>
    %217 = vector.multi_reduction <maximumf>, %216, %cst_72 [0] : vector<8x8xf32> to vector<8xf32>
    %218 = vector.shape_cast %217 : vector<8xf32> to vector<1x8xf32>
    %cst_73 = arith.constant dense<0.000000e+00> : vector<1xf32>
    %219 = vector.multi_reduction <add>, %218, %cst_73 [1] : vector<1x8xf32> to vector<1xf32>
    %220 = vector.shape_cast %219 : vector<1xf32> to vector<1x1xf32>
    %cst_74 = arith.constant dense<0.000000e+00> : vector<8xf32>
    %221 = vector.multi_reduction <add>, %216, %cst_74 [0] : vector<8x8xf32> to vector<8xf32>
    %222 = vector.shape_cast %221 : vector<8xf32> to vector<1x8xf32>
    %cst_75 = arith.constant dense<0.000000e+00> : vector<1xf32>
    %223 = vector.multi_reduction <add>, %222, %cst_75 [1] : vector<1x8xf32> to vector<1xf32>
    %224 = vector.shape_cast %223 : vector<1xf32> to vector<1x1xf32>
    %cst_76 = arith.constant 1.562500e-02 : f32
    %225 = vector.broadcast %cst_76 : f32 to vector<1x1xf32>
    %226 = arith.mulf %224, %225 : vector<1x1xf32>
    %cst_77 = arith.constant dense<0.000000e+00> : vector<1x32xf32>
    %227 = tpu.matmul %211, %10, %cst_77 {dimension_numbers = #tpu.dot_dimension_numbers<[1], [0], [0], [1], [0, 0, 1, 1], [], []>} : vector<1x32xf32>, vector<32x32xf32>, vector<1x32xf32> -> vector<1x32xf32>
    %228 = vector.broadcast %220 : vector<1x1xf32> to vector<1x32xf32>
    %229 = arith.mulf %228, %11 : vector<1x32xf32>
    %230 = arith.addf %227, %229 : vector<1x32xf32>
    %231 = vector.broadcast %226 : vector<1x1xf32> to vector<1x32xf32>
    %232 = arith.mulf %231, %12 : vector<1x32xf32>
    %233 = arith.addf %230, %232 : vector<1x32xf32>
    %234 = arith.addf %233, %13 : vector<1x32xf32>
    %cst_78 = arith.constant 0.000000e+00 : f32
    %235 = vector.broadcast %cst_78 : f32 to vector<1x32xf32>
    %236 = arith.maximumf %234, %235 : vector<1x32xf32>
    %237 = arith.mulf %236, %14 : vector<1x32xf32>
    %238 = arith.addf %237, %15 : vector<1x32xf32>
    %cst_79 = arith.constant dense<0.000000e+00> : vector<1xf32>
    %239 = vector.multi_reduction <add>, %238, %cst_79 [1] : vector<1x32xf32> to vector<1xf32>
    %240 = vector.shape_cast %239 : vector<1xf32> to vector<1x1xf32>
    %241 = arith.negf %240 : vector<1x1xf32>
    %242 = math.exp %241 : vector<1x1xf32>
    %cst_80 = arith.constant 1.000000e+00 : f32
    %243 = vector.broadcast %cst_80 : f32 to vector<1x1xf32>
    %244 = arith.addf %243, %242 : vector<1x1xf32>
    %245 = arith.divf %243, %244 : vector<1x1xf32>
    %246 = tpu.iota {dimensions = array<i32: 0>} : vector<8x1xi32>
    %c0_i32 = arith.constant 0 : i32
    %247 = vector.broadcast %c0_i32 : i32 to vector<8x1xi32>
    %248 = arith.cmpi eq, %246, %247 : vector<8x1xi32>
    %cst_81 = arith.constant 0.000000e+00 : f32
    %249 = vector.shape_cast %245 : vector<1x1xf32> to vector<1x1xf32>
    %250 = vector.broadcast %249 : vector<1x1xf32> to vector<8x1xf32>
    %251 = vector.broadcast %cst_81 : f32 to vector<8x1xf32>
    %252 = arith.select %248, %250, %251 : vector<8x1xi1>, vector<8x1xf32>
    %cst_82 = arith.constant 0.000000e+00 : f32
    %253 = vector.broadcast %cst_82 : f32 to vector<8x111xf32>
    %254 = tpu.concatenate %214, %216, %252, %253 in 1 : vector<8x8xf32>, vector<8x8xf32>, vector<8x1xf32>, vector<8x111xf32> -> vector<8x128xf32>
    %c0_83 = arith.constant 0 : index
    %c0_84 = arith.constant 0 : index
    %c0_85 = arith.constant 0 : index
    %255 = vector.load %arg3[%c0_83, %c0_84, %c0_85] : memref<1x8x128xf32, #tpu.memory_space<vmem>>, vector<1x8x128xf32>
    %256 = vector.shape_cast %255 : vector<1x8x128xf32> to vector<8x128xf32>
    %257 = vector.shape_cast %254 : vector<8x128xf32> to vector<1x8x128xf32>
    tpu.vector_store %arg3[%c0_83, %c0_84, %c0_85], %257 {strides = array<i32>} : memref<1x8x128xf32, #tpu.memory_space<vmem>>, vector<1x8x128xf32>,
    return
  }
  func.func @transform_0(%arg0: i32) -> (i32, i32, i32) {
    %c0_i32 = arith.constant 0 : i32
    %c0_i32_0 = arith.constant 0 : i32
    %c0_i32_1 = arith.constant 0 : i32
    return %arg0, %c0_i32, %c0_i32_0 : i32, i32, i32
  }
  func.func @transform_1(%arg0: i32) -> (i32, i32) {
    %c0_i32 = arith.constant 0 : i32
    %c0_i32_0 = arith.constant 0 : i32
    %c0_i32_1 = arith.constant 0 : i32
    return %c0_i32, %c0_i32_0 : i32, i32
  }
  func.func @transform_2(%arg0: i32) -> (i32, i32, i32) {
    %c0_i32 = arith.constant 0 : i32
    %c0_i32_0 = arith.constant 0 : i32
    %c0_i32_1 = arith.constant 0 : i32
    return %arg0, %c0_i32, %c0_i32_0 : i32, i32, i32
  }
}

</mosaic_0001>

<llo_original>
// kernel: interact_encoder_forward.1
$region0: #{interact_encoder_forward.1}
  #allocation0 [shape = 'u32[]', space=smem, size = 0x4, offset = 0x4, fixed_abs, tag = 'smem constant byte address 0x4 - core index']
  #allocation1 [shape = 'u32[144,128]{1,0:T(1,128)}', space=vmem, size = 0x12000, scoped, tag = 'internal scratch']
  #allocation2 [shape = 'f32[8,96]{1,0:T(8,128)}', space=vmem, size = 0x1000, scoped, tag = 'scratch operand']
  #allocation3 [shape = 'f32[8,32]{1,0:T(8,128)}', space=vmem, size = 0x1000, scoped, tag = 'scratch operand']
  %s0 = inlined_call_operand.vmem [shape: f32[4,24,128], index: 0, kind: input, shape index: {}]
  %s1 = inlined_call_operand.vmem [shape: f32[152,128], index: 1, kind: input, shape index: {}]
  %s2 = inlined_call_operand.vmem [shape: f32[4,8,128], index: 2, kind: output, shape index: {}]
  %s3 = sld [smem:[#allocation0]]
  $region41: #{interact_encoder_forward.1} parent=0
    _
  %s5 = ssub.s32 1, %s3
  %s6 = scalar_select 0, %s5, %s3
  loop: start=0, step=1, limit=6
  $region2: #{interact_encoder_forward.1} parent=0 // loop_pre_header
    _
  $region3: #{interact_encoder_forward.1} parent=0 // loop_header
    %s8 = sphi 0, %s12
    %p9 = scmp.ge.s32.totalorder %s8, 6
    %s18 = sphi 0, %s20
    %s21 = sphi 0, %s18
    %s22 = sphi 0, %s21
    %s38 = sphi 0, %s22
    %s42 = sphi 0, %s42
    %s44 = sphi 0, %s42
    %s45 = sphi 0, %s44
    %s59 = sphi 0, %s45
    %s65 = sphi 0, %s67
    %s68 = sphi 0, %s65
    %s69 = sphi 0, %s68
    %s85 = sphi 0, %s69
  $region4: #{interact_encoder_forward.1} parent=0 // loop_header_branch
    %11 = sbr.rel (%p9) target = $region8
  $region5: #{interact_encoder_forward.1} parent=0 // loop_body
    %s13 = ssub.s32 %s8, 1
    %s14 = ssub.s32 %s8, 2
    %s15 = sadd.s32 %s8, 1
    %s16 = ssub.s32 %s8, %s15
    %p17 = scmp.eq.s32.totalorder %s16, 0
    %s19 = sadd.s32 %s18, 1
    %s20 = scalar_select %p17, %s18, %s19
    %p23 = pneg %p17
    %p24 = scmp.eq.s32.totalorder %s8, 3
    %p25 = por %p23, %p24
    %p26 = scmp.ne.s32.totalorder %s18, %s21
    %p27 = scmp.eq.s32.totalorder %s8, 0
    %p28 = por %p26, %p27
    %p29 = scmp.ne.s32.totalorder %s18, %s21
    %p30 = scmp.eq.s32.totalorder %s13, 3
    %p31 = por %p29, %p30
    %p32 = scmp.ne.s32.totalorder %s21, %s22
    %p33 = scmp.eq.s32.totalorder %s13, 0
    %p34 = por %p32, %p33
    %p35 = scmp.ne.s32.totalorder %s21, %s22
    %p36 = scmp.eq.s32.totalorder %s14, 3
    %p37 = por %p35, %p36
    %p39 = scmp.ne.s32.totalorder %s22, %s38
    %p40 = scmp.eq.s32.totalorder %s14, 0
    %p41 = por %p39, %p40
    %s43 = sadd.s32 %s42, 1
    %p46 = scmp.eq.s32.totalorder %s8, 3
    %p47 = scmp.ne.s32.totalorder %s42, %s44
    %p48 = scmp.eq.s32.totalorder %s8, 0
    %p49 = por %p47, %p48
    %p50 = scmp.ne.s32.totalorder %s42, %s44
    %p51 = scmp.eq.s32.totalorder %s13, 3
    %p52 = por %p50, %p51
    %p53 = scmp.ne.s32.totalorder %s44, %s45
    %p54 = scmp.eq.s32.totalorder %s13, 0
    %p55 = por %p53, %p54
    %p56 = scmp.ne.s32.totalorder %s44, %s45
    %p57 = scmp.eq.s32.totalorder %s14, 3
    %p58 = por %p56, %p57
    %p60 = scmp.ne.s32.totalorder %s45, %s59
    %p61 = scmp.eq.s32.totalorder %s14, 0
    %p62 = por %p60, %p61
    %s63 = ssub.s32 %s8, %s15
    %p64 = scmp.eq.s32.totalorder %s63, 0
    %s66 = sadd.s32 %s65, 1
    %s67 = scalar_select %p64, %s65, %s66
    %p70 = pneg %p64
    %p71 = scmp.eq.s32.totalorder %s8, 3
    %p72 = por %p70, %p71
    %p73 = scmp.ne.s32.totalorder %s65, %s68
    %p74 = scmp.eq.s32.totalorder %s8, 0
    %p75 = por %p73, %p74
    %p76 = scmp.ne.s32.totalorder %s65, %s68
    %p77 = scmp.eq.s32.totalorder %s13, 3
    %p78 = por %p76, %p77
    %p79 = scmp.ne.s32.totalorder %s68, %s69
    %p80 = scmp.eq.s32.totalorder %s13, 0
    %p81 = por %p79, %p80
    %p82 = scmp.ne.s32.totalorder %s68, %s69
    %p83 = scmp.eq.s32.totalorder %s14, 3
    %p84 = por %p82, %p83
    %p86 = scmp.ne.s32.totalorder %s69, %s85
    %p87 = scmp.eq.s32.totalorder %s14, 0
    %p88 = por %p86, %p87
    %p89 = scmp.le.s32.totalorder 1, %s8
    %p90 = scmp.lt.s32.totalorder %s8, 5
    %p91 = pnand %p89, %p90
    %p92 = pneg %p91
    // Predicated region
    $region9: #{interact_encoder_forward.1} parent=5 // pred_check
      _
    $region10: #{interact_encoder_forward.1} parent=5 // pred_check_branch
      %94 = sbr.rel (%p91) target = $region12
    $region11: #{interact_encoder_forward.1} parent=5 // pred_region
      %s95 = ssub.s32 %s8, 1
      // Predicated region
      $region13: #{interact_encoder_forward.1} parent=11 // pred_check
        %p96 = pneg %p55
      $region14: #{interact_encoder_forward.1} parent=11 // pred_check_branch
        %98 = sbr.rel (%p96) target = $region16
      $region15: #{interact_encoder_forward.1} parent=11 // pred_region
        _
      $region16: #{interact_encoder_forward.1} parent=11 // pred_fallthru
        _
    $region12: #{interact_encoder_forward.1} parent=5 // pred_fallthru
      _
    %p99 = scmp.lt.s32.totalorder %s8, 4
    // Predicated region
    $region17: #{interact_encoder_forward.1} parent=5 // pred_check
      %p100 = pneg %p99
    $region18: #{interact_encoder_forward.1} parent=5 // pred_check_branch
      %102 = sbr.rel (%p100) target = $region20
    $region19: #{interact_encoder_forward.1} parent=5 // pred_region
      // Predicated region
      $region21: #{interact_encoder_forward.1} parent=19 // pred_check
        %p103 = pneg %p28
      $region22: #{interact_encoder_forward.1} parent=19 // pred_check_branch
        %105 = sbr.rel (%p103) target = $region24
      $region23: #{interact_encoder_forward.1} parent=19 // pred_region
        %p106 = scmp.lt.s32.totalorder %s8, 3
        %s107 = scalar_select %p106, %s8, 3
        %s108 = smul.addr %s107, 3
        %s109 = smul.addr %s108, 8
        %s110 = scalar_lea.vmem %s0, %s109
      $region24: #{interact_encoder_forward.1} parent=19 // pred_fallthru
        _
    $region20: #{interact_encoder_forward.1} parent=5 // pred_fallthru
      _
    %p111 = scmp.le.s32.totalorder 1, %s8
    %p112 = scmp.lt.s32.totalorder %s8, 5
    %p113 = pnand %p111, %p112
    %p114 = pneg %p113
    // Predicated region
    $region25: #{interact_encoder_forward.1} parent=5 // pred_check
      _
    $region26: #{interact_encoder_forward.1} parent=5 // pred_check_branch
      %116 = sbr.rel (%p113) target = $region28
    $region27: #{interact_encoder_forward.1} parent=5 // pred_region
      %s117 = ssub.s32 %s8, 1
      %p118 = scmp.lt.s32.totalorder %s13, 3
      %s119 = scalar_select %p118, %s13, 3
      %s120 = smul.addr %s119, 3
      %s121 = smul.addr %s120, 8
      %s122 = scalar_lea.vmem %s0, %s121
      %p123 = pneg %p34
      %p124 = pneg %p31
      %p125 = pneg %p55
      %p126 = pneg %p52
      %p127 = pneg %p81
      %p128 = pneg %p78
      %p129 = scmp.lt.s32.totalorder %s13, 3
      %s130 = scalar_select %p129, %s13, 3
      %s131 = smul.addr %s130, 8
      %s132 = scalar_lea.vmem %s2, %s131
      %p133 = scmp.lt.s32.totalorder %s13, 3
      %s134 = scalar_select %p133, %s13, 3
      %s135 = smul.addr %s134, 3
      %s136 = smul.addr %s135, 8
      %s137 = scalar_lea.vmem %s0, %s136
      %p138 = scmp.lt.s32.totalorder %s13, 3
      %s139 = scalar_select %p138, %s13, 3
      %s140 = smul.addr %s139, 8
      %s141 = scalar_lea.vmem %s2, %s140
      %v142 = vld [vmem:[%s137] sm:$0xff]
      %v143 = vld [vmem:[%s137 + $0x8] sm:$0xff]
      %v144 = vld [vmem:[%s137 + $0x10] sm:$0x1]
      %v145 = vld [vmem:[%s1] sm:$0xff]
      %v146 = vld [vmem:[%s1 + $0x8] sm:$0xff]
      %v147 = vld [vmem:[%s1 + $0x10] sm:$0xff]
      %v148 = vld [vmem:[%s1 + $0x18] sm:$0xff]
      %v149 = vld [vmem:[%s1 + $0x20] sm:$0xff]
      %v150 = vld [vmem:[%s1 + $0x28] sm:$0xff]
      %v151 = vld [vmem:[%s1 + $0x30] sm:$0xff]
      %v152 = vld [vmem:[%s1 + $0x38] sm:$0xff]
      %v153 = vld [vmem:[%s1 + $0x40] sm:$0xff]
      %v154 = vld [vmem:[%s1 + $0x48] sm:$0xff]
      %v155 = vld [vmem:[%s1 + $0x50] sm:$0xff]
      %v156 = vld [vmem:[%s1 + $0x58] sm:$0xff]
      %v157 = vld [vmem:[%s1 + $0x60] sm:$0x1]
      %v158 = vld [vmem:[%s1 + $0x68] sm:$0x1]
      %v159 = vld [vmem:[%s1 + $0x70] sm:$0xff]
      %v160 = vld [vmem:[%s1 + $0x78] sm:$0xff]
      %v161 = vld [vmem:[%s1 + $0x80] sm:$0xff]
      %v162 = vld [vmem:[%s1 + $0x88] sm:$0xff]
      %v163 = vld [vmem:[%s1 + $0x90] sm:$0x1]
      %v164 = vld [vmem:[%s1 + $0x91] sm:$0x1]
      %v165 = vld [vmem:[%s1 + $0x92] sm:$0x1]
      %v166 = vld [vmem:[%s1 + $0x93] sm:$0x1]
      %v167 = vld [vmem:[%s1 + $0x94] sm:$0x1]
      %v168 = vlaneseq
      %v169 = vshrl.u32 %v168, 7
      %v170 = vsub.s32 0, %v169
      %v171 = vrot.slane %v157, %v170
      %vm172 = vcmask 523264
      %v174 = vsel %vm172, %v142, 0
      %176 = vmatprep.subr.mxu0 0.0
      %177 = vmatpush1.msra.mxu0 0.0
      %178 = vmatprep.subr.mxu0 0.0
      %179 = vmatpush1.msra.mxu0 0.0
      %180 = vmatprep.subr.mxu0 0.0
      %181 = vmatpush1.msra.mxu0 0.0
      %182 = vmatprep.subr.mxu0 0.0
      %183 = vmatpush1.msra.mxu0 0.0
      %184 = vmatprep.subr.mxu0 0.0
      %185 = vmatpush1.msra.mxu0 0.0
      %186 = vmatprep.subr.mxu0 0.0
      %187 = vmatpush1.msra.mxu0 0.0
      %188 = vmatprep.subr.mxu0 0.0
      %189 = vmatpush1.msra.mxu0 0.0
      %190 = vmatprep.subr.mxu0 0.0
      %191 = vmatpush1.msra.mxu0 0.0
      %192 = vmatprep.subr.mxu0 0.0
      %193 = vmatpush1.msra.mxu0 %v152
      %194 = vmatprep.subr.mxu0 0.0
      %195 = vmatpush1.msra.mxu0 %v151
      %196 = vmatprep.subr.mxu0 0.0
      %197 = vmatpush1.msra.mxu0 %v150
      %198 = vmatprep.subr.mxu0 0.0
      %199 = vmatpush1.msra.mxu0 %v149
      %200 = vmatprep.subr.mxu0 0.0
      %201 = vmatpush1.msra.mxu0 %v148
      %202 = vmatprep.subr.mxu0 0.0
      %203 = vmatpush1.msra.mxu0 %v147
      %204 = vmatprep.subr.mxu0 0.0
      %205 = vmatpush1.msra.mxu0 %v146
      %206 = vmatprep.subr.mxu0 0.0
      %207 = vmatpush1.msra.mxu0 %v145
      %208 = vmatprep.subr.mxu0 0.0
      %209 = vmatpush2.msra.mxu0 0.0
      %210 = vmatprep.subr.mxu0 0.0
      %211 = vmatpush2.msra.mxu0 0.0
      %212 = vmatprep.subr.mxu0 0.0
      %213 = vmatpush2.msra.mxu0 0.0
      %214 = vmatprep.subr.mxu0 0.0
      %215 = vmatpush2.msra.mxu0 0.0
      %216 = vmatprep.subr.mxu0 0.0
      %217 = vmatpush2.msra.mxu0 0.0
      %218 = vmatprep.subr.mxu0 0.0
      %219 = vmatpush2.msra.mxu0 0.0
      %220 = vmatprep.subr.mxu0 0.0
      %221 = vmatpush2.msra.mxu0 0.0
      %222 = vmatprep.subr.mxu0 0.0
      %223 = vmatpush2.msra.mxu0 0.0
      %224 = vmatprep.subr.mxu0 0.0
      %225 = vmatpush2.msra.mxu0 0.0
      %226 = vmatprep.subr.mxu0 0.0
      %227 = vmatpush2.msra.mxu0 0.0
      %228 = vmatprep.subr.mxu0 0.0
      %229 = vmatpush2.msra.mxu0 0.0
      %230 = vmatprep.subr.mxu0 0.0
      %231 = vmatpush2.msra.mxu0 0.0
      %232 = vmatprep.subr.mxu0 0.0
      %233 = vmatpush2.msra.mxu0 0.0
      %234 = vmatprep.subr.mxu0 0.0
      %235 = vmatpush2.msra.mxu0 0.0
      %236 = vmatprep.subr.mxu0 0.0
      %237 = vmatpush2.msra.mxu0 0.0
      %238 = vmatprep.subr.mxu0 0.0
      %239 = vmatpush2.msra.mxu0 0.0
      %240 = vmatprep.mubr.f32.mxu0 0.0
      %241 = vmatmul.mubr.f32.gmra.mxu0 %v174
      %v242 = vpop.f32.mrf.mxu0
      %v243 = vadd.f32 %v171, %v242
      %v244 = vpop.f32.mrf.mxu0
      %245 = vdwg.mxu0
      %vm246 = vcmask 785408
      %247 = vst.msk [vmem:[#allocation2] sm:$0xff] %vm246, %v243
      %v248 = vld [vmem:[#allocation2] sm:$0x1]
      %vm249 = vcmask 261120
      %v251 = vsel %vm249, 0.0, 0
      %253 = vmatprep.subr.mxu0 0.0
      %254 = vmatpush1.msra.mxu0 0.0
      %255 = vmatprep.subr.mxu0 0.0
      %256 = vmatpush1.msra.mxu0 0.0
      %257 = vmatprep.subr.mxu0 0.0
      %258 = vmatpush1.msra.mxu0 0.0
      %259 = vmatprep.subr.mxu0 0.0
      %260 = vmatpush1.msra.mxu0 0.0
      %261 = vmatprep.subr.mxu0 0.0
      %262 = vmatpush1.msra.mxu0 0.0
      %263 = vmatprep.subr.mxu0 0.0
      %264 = vmatpush1.msra.mxu0 0.0
      %265 = vmatprep.subr.mxu0 0.0
      %266 = vmatpush1.msra.mxu0 0.0
      %267 = vmatprep.subr.mxu0 0.0
      %268 = vmatpush1.msra.mxu0 0.0
      %269 = vmatprep.subr.mxu0 0.0
      %270 = vmatpush1.msra.mxu0 0.0
      %271 = vmatprep.subr.mxu0 0.0
      %272 = vmatpush1.msra.mxu0 0.0
      %273 = vmatprep.subr.mxu0 0.0
      %274 = vmatpush1.msra.mxu0 0.0
      %275 = vmatprep.subr.mxu0 0.0
      %276 = vmatpush1.msra.mxu0 0.0
      %277 = vmatprep.subr.mxu0 0.0
      %278 = vmatpush1.msra.mxu0 %v156
      %279 = vmatprep.subr.mxu0 0.0
      %280 = vmatpush1.msra.mxu0 %v155
      %281 = vmatprep.subr.mxu0 0.0
      %282 = vmatpush1.msra.mxu0 %v154
      %283 = vmatprep.subr.mxu0 0.0
      %284 = vmatpush1.msra.mxu0 %v153
      %285 = vmatprep.subr.mxu0 0.0
      %286 = vmatpush2.msra.mxu0 0.0
      %287 = vmatprep.subr.mxu0 0.0
      %288 = vmatpush2.msra.mxu0 0.0
      %289 = vmatprep.subr.mxu0 0.0
      %290 = vmatpush2.msra.mxu0 0.0
      %291 = vmatprep.subr.mxu0 0.0
      %292 = vmatpush2.msra.mxu0 0.0
      %293 = vmatprep.subr.mxu0 0.0
      %294 = vmatpush2.msra.mxu0 0.0
      %295 = vmatprep.subr.mxu0 0.0
      %296 = vmatpush2.msra.mxu0 0.0
      %297 = vmatprep.subr.mxu0 0.0
      %298 = vmatpush2.msra.mxu0 0.0
      %299 = vmatprep.subr.mxu0 0.0
      %300 = vmatpush2.msra.mxu0 0.0
      %301 = vmatprep.subr.mxu0 0.0
      %302 = vmatpush2.msra.mxu0 0.0
      %303 = vmatprep.subr.mxu0 0.0
      %304 = vmatpush2.msra.mxu0 0.0
      %305 = vmatprep.subr.mxu0 0.0
      %306 = vmatpush2.msra.mxu0 0.0
      %307 = vmatprep.subr.mxu0 0.0
      %308 = vmatpush2.msra.mxu0 0.0
      %309 = vmatprep.subr.mxu0 0.0
      %310 = vmatpush2.msra.mxu0 0.0
      %311 = vmatprep.subr.mxu0 0.0
      %312 = vmatpush2.msra.mxu0 0.0
      %313 = vmatprep.subr.mxu0 0.0
      %314 = vmatpush2.msra.mxu0 0.0
      %315 = vmatprep.subr.mxu0 0.0
      %316 = vmatpush2.msra.mxu0 0.0
      %317 = vmatprep.mubr.f32.mxu0 0.0
      %318 = vmatmul.mubr.f32.gmra.mxu0 %v251
      %v319 = vpop.f32.mrf.mxu0
      %v320 = vadd.f32 %v158, %v319
      %v321 = vpop.f32.mrf.mxu0
      %322 = vdwg.mxu0
      %v323 = vadd.f32 %v248, %v320
      %v324 = vxor.u32 %v323, 2147483648
      %v325 = vmul.f32 %v324, 1.442695
      %v326 = vpow.pop %v325
      %v327 = vadd.f32 %v326, 1.0
      %v328 = vrcp.pop %v327
      %v329 = vmul.f32 1.0, %v328
      %331 = vrot.lane.b32.xlu0 %v320, 64
      %v332 = vpop.permute.xlu0 %331
      %v334 = vmul.f32 %v329, %v332
      %336 = vrot.lane.b32.xlu0 %v334, 64
      %v337 = vpop.permute.xlu0 %336
      %v339 = vadd.f32 %v248, %v337
      %v340 = vtanh.pop %v339
      %v341 = vsub.f32 1.0, %v329
      %343 = vrot.lane.b32.xlu0 %v340, 96
      %v344 = vpop.permute.xlu0 %343
      %v346 = vmul.f32 %v341, %v344
      %v347 = vmul.f32 %v329, 0.0
      %v348 = vadd.f32 %v346, %v347
      %350 = vrot.lane.b32.xlu0 %v348, 96
      %v351 = vpop.permute.xlu0 %350
      %vm353 = vcmask 253952
      %354 = vst.msk [vmem:[#allocation3] sm:$0x1] %vm353, %v351
      %v355 = vld [vmem:[#allocation2 + $0x1] sm:$0x1]
      %v356 = vsel %vm249, %v351, 0
      %358 = vmatprep.subr.mxu0 0.0
      %359 = vmatpush1.msra.mxu0 0.0
      %360 = vmatprep.subr.mxu0 0.0
      %361 = vmatpush1.msra.mxu0 0.0
      %362 = vmatprep.subr.mxu0 0.0
      %363 = vmatpush1.msra.mxu0 0.0
      %364 = vmatprep.subr.mxu0 0.0
      %365 = vmatpush1.msra.mxu0 0.0
      %366 = vmatprep.subr.mxu0 0.0
      %367 = vmatpush1.msra.mxu0 0.0
      %368 = vmatprep.subr.mxu0 0.0
      %369 = vmatpush1.msra.mxu0 0.0
      %370 = vmatprep.subr.mxu0 0.0
      %371 = vmatpush1.msra.mxu0 0.0
      %372 = vmatprep.subr.mxu0 0.0
      %373 = vmatpush1.msra.mxu0 0.0
      %374 = vmatprep.subr.mxu0 0.0
      %375 = vmatpush1.msra.mxu0 0.0
      %376 = vmatprep.subr.mxu0 0.0
      %377 = vmatpush1.msra.mxu0 0.0
      %378 = vmatprep.subr.mxu0 0.0
      %379 = vmatpush1.msra.mxu0 0.0
      %380 = vmatprep.subr.mxu0 0.0
      %381 = vmatpush1.msra.mxu0 0.0
      %382 = vmatprep.subr.mxu0 0.0
      %383 = vmatpush1.msra.mxu0 %v156
      %384 = vmatprep.subr.mxu0 0.0
      %385 = vmatpush1.msra.mxu0 %v155
      %386 = vmatprep.subr.mxu0 0.0
      %387 = vmatpush1.msra.mxu0 %v154
      %388 = vmatprep.subr.mxu0 0.0
      %389 = vmatpush1.msra.mxu0 %v153
      %390 = vmatprep.subr.mxu0 0.0
      %391 = vmatpush2.msra.mxu0 0.0
      %392 = vmatprep.subr.mxu0 0.0
      %393 = vmatpush2.msra.mxu0 0.0
      %394 = vmatprep.subr.mxu0 0.0
      %395 = vmatpush2.msra.mxu0 0.0
      %396 = vmatprep.subr.mxu0 0.0
      %397 = vmatpush2.msra.mxu0 0.0
      %398 = vmatprep.subr.mxu0 0.0
      %399 = vmatpush2.msra.mxu0 0.0
      %400 = vmatprep.subr.mxu0 0.0
      %401 = vmatpush2.msra.mxu0 0.0
      %402 = vmatprep.subr.mxu0 0.0
      %403 = vmatpush2.msra.mxu0 0.0
      %404 = vmatprep.subr.mxu0 0.0
      %405 = vmatpush2.msra.mxu0 0.0
      %406 = vmatprep.subr.mxu0 0.0
      %407 = vmatpush2.msra.mxu0 0.0
      %408 = vmatprep.subr.mxu0 0.0
      %409 = vmatpush2.msra.mxu0 0.0
      %410 = vmatprep.subr.mxu0 0.0
      %411 = vmatpush2.msra.mxu0 0.0
      %412 = vmatprep.subr.mxu0 0.0
      %413 = vmatpush2.msra.mxu0 0.0
      %414 = vmatprep.subr.mxu0 0.0
      %415 = vmatpush2.msra.mxu0 0.0
      %416 = vmatprep.subr.mxu0 0.0
      %417 = vmatpush2.msra.mxu0 0.0
      %418 = vmatprep.subr.mxu0 0.0
      %419 = vmatpush2.msra.mxu0 0.0
      %420 = vmatprep.subr.mxu0 0.0
      %421 = vmatpush2.msra.mxu0 0.0
      %422 = vmatprep.mubr.f32.mxu0 0.0
      %423 = vmatmul.mubr.f32.gmra.mxu0 %v356
      %v424 = vpop.f32.mrf.mxu0
      %v425 = vadd.f32 %v158, %v424
      %v426 = vpop.f32.mrf.mxu0
      %427 = vdwg.mxu0
      %v428 = vadd.f32 %v355, %v425
      %v429 = vxor.u32 %v428, 2147483648
      %v430 = vmul.f32 %v429, 1.442695
      %v431 = vpow.pop %v430
      %v432 = vadd.f32 %v431, 1.0
      %v433 = vrcp.pop %v432
      %v434 = vmul.f32 1.0, %v433
      %436 = vrot.lane.b32.xlu0 %v425, 64
      %v437 = vpop.permute.xlu0 %436
      %v439 = vmul.f32 %v434, %v437
      %441 = vrot.lane.b32.xlu0 %v439, 64
      %v442 = vpop.permute.xlu0 %441
      %v444 = vadd.f32 %v355, %v442
      %v445 = vtanh.pop %v444
      %v446 = vsub.f32 1.0, %v434
      %448 = vrot.lane.b32.xlu0 %v445, 96
      %v449 = vpop.permute.xlu0 %448
      %v451 = vmul.f32 %v446, %v449
      %v452 = vmul.f32 %v434, %v348
      %v453 = vadd.f32 %v451, %v452
      %455 = vrot.lane.b32.xlu0 %v453, 96
      %v456 = vpop.permute.xlu0 %455
      %458 = vst.msk [vmem:[#allocation3 + $0x1] sm:$0x1] %vm353, %v456
      %v459 = vld [vmem:[#allocation2 + $0x2] sm:$0x1]
      %v460 = vsel %vm249, %v456, 0
      %462 = vmatprep.subr.mxu0 0.0
      %463 = vmatpush1.msra.mxu0 0.0
      %464 = vmatprep.subr.mxu0 0.0
      %465 = vmatpush1.msra.mxu0 0.0
      %466 = vmatprep.subr.mxu0 0.0
      %467 = vmatpush1.msra.mxu0 0.0
      %468 = vmatprep.subr.mxu0 0.0
      %469 = vmatpush1.msra.mxu0 0.0
      %470 = vmatprep.subr.mxu0 0.0
      %471 = vmatpush1.msra.mxu0 0.0
      %472 = vmatprep.subr.mxu0 0.0
      %473 = vmatpush1.msra.mxu0 0.0
      %474 = vmatprep.subr.mxu0 0.0
      %475 = vmatpush1.msra.mxu0 0.0
      %476 = vmatprep.subr.mxu0 0.0
      %477 = vmatpush1.msra.mxu0 0.0
      %478 = vmatprep.subr.mxu0 0.0
      %479 = vmatpush1.msra.mxu0 0.0
      %480 = vmatprep.subr.mxu0 0.0
      %481 = vmatpush1.msra.mxu0 0.0
      %482 = vmatprep.subr.mxu0 0.0
      %483 = vmatpush1.msra.mxu0 0.0
      %484 = vmatprep.subr.mxu0 0.0
      %485 = vmatpush1.msra.mxu0 0.0
      %486 = vmatprep.subr.mxu0 0.0
      %487 = vmatpush1.msra.mxu0 %v156
      %488 = vmatprep.subr.mxu0 0.0
      %489 = vmatpush1.msra.mxu0 %v155
      %490 = vmatprep.subr.mxu0 0.0
      %491 = vmatpush1.msra.mxu0 %v154
      %492 = vmatprep.subr.mxu0 0.0
      %493 = vmatpush1.msra.mxu0 %v153
      %494 = vmatprep.subr.mxu0 0.0
      %495 = vmatpush2.msra.mxu0 0.0
      %496 = vmatprep.subr.mxu0 0.0
      %497 = vmatpush2.msra.mxu0 0.0
      %498 = vmatprep.subr.mxu0 0.0
      %499 = vmatpush2.msra.mxu0 0.0
      %500 = vmatprep.subr.mxu0 0.0
      %501 = vmatpush2.msra.mxu0 0.0
      %502 = vmatprep.subr.mxu0 0.0
      %503 = vmatpush2.msra.mxu0 0.0
      %504 = vmatprep.subr.mxu0 0.0
      %505 = vmatpush2.msra.mxu0 0.0
      %506 = vmatprep.subr.mxu0 0.0
      %507 = vmatpush2.msra.mxu0 0.0
      %508 = vmatprep.subr.mxu0 0.0
      %509 = vmatpush2.msra.mxu0 0.0
      %510 = vmatprep.subr.mxu0 0.0
      %511 = vmatpush2.msra.mxu0 0.0
      %512 = vmatprep.subr.mxu0 0.0
      %513 = vmatpush2.msra.mxu0 0.0
      %514 = vmatprep.subr.mxu0 0.0
      %515 = vmatpush2.msra.mxu0 0.0
      %516 = vmatprep.subr.mxu0 0.0
      %517 = vmatpush2.msra.mxu0 0.0
      %518 = vmatprep.subr.mxu0 0.0
      %519 = vmatpush2.msra.mxu0 0.0
      %520 = vmatprep.subr.mxu0 0.0
      %521 = vmatpush2.msra.mxu0 0.0
      %522 = vmatprep.subr.mxu0 0.0
      %523 = vmatpush2.msra.mxu0 0.0
      %524 = vmatprep.subr.mxu0 0.0
      %525 = vmatpush2.msra.mxu0 0.0
      %526 = vmatprep.mubr.f32.mxu0 0.0
      %527 = vmatmul.mubr.f32.gmra.mxu0 %v460
      %v528 = vpop.f32.mrf.mxu0
      %v529 = vadd.f32 %v158, %v528
      %v530 = vpop.f32.mrf.mxu0
      %531 = vdwg.mxu0
      %v532 = vadd.f32 %v459, %v529
      %v533 = vxor.u32 %v532, 2147483648
      %v534 = vmul.f32 %v533, 1.442695
      %v535 = vpow.pop %v534
      %v536 = vadd.f32 %v535, 1.0
      %v537 = vrcp.pop %v536
      %v538 = vmul.f32 1.0, %v537
      %540 = vrot.lane.b32.xlu0 %v529, 64
      %v541 = vpop.permute.xlu0 %540
      %v543 = vmul.f32 %v538, %v541
      %545 = vrot.lane.b32.xlu0 %v543, 64
      %v546 = vpop.permute.xlu0 %545
      %v548 = vadd.f32 %v459, %v546
      %v549 = vtanh.pop %v548
      %v550 = vsub.f32 1.0, %v538
      %552 = vrot.lane.b32.xlu0 %v549, 96
      %v553 = vpop.permute.xlu0 %552
      %v555 = vmul.f32 %v550, %v553
      %v556 = vmul.f32 %v538, %v453
      %v557 = vadd.f32 %v555, %v556
      %559 = vrot.lane.b32.xlu0 %v557, 96
      %v560 = vpop.permute.xlu0 %559
      %562 = vst.msk [vmem:[#allocation3 + $0x2] sm:$0x1] %vm353, %v560
      %v563 = vld [vmem:[#allocation2 + $0x3] sm:$0x1]
      %v564 = vsel %vm249, %v560, 0
      %566 = vmatprep.subr.mxu0 0.0
      %567 = vmatpush1.msra.mxu0 0.0
      %568 = vmatprep.subr.mxu0 0.0
      %569 = vmatpush1.msra.mxu0 0.0
      %570 = vmatprep.subr.mxu0 0.0
      %571 = vmatpush1.msra.mxu0 0.0
      %572 = vmatprep.subr.mxu0 0.0
      %573 = vmatpush1.msra.mxu0 0.0
      %574 = vmatprep.subr.mxu0 0.0
      %575 = vmatpush1.msra.mxu0 0.0
      %576 = vmatprep.subr.mxu0 0.0
      %577 = vmatpush1.msra.mxu0 0.0
      %578 = vmatprep.subr.mxu0 0.0
      %579 = vmatpush1.msra.mxu0 0.0
      %580 = vmatprep.subr.mxu0 0.0
      %581 = vmatpush1.msra.mxu0 0.0
      %582 = vmatprep.subr.mxu0 0.0
      %583 = vmatpush1.msra.mxu0 0.0
      %584 = vmatprep.subr.mxu0 0.0
      %585 = vmatpush1.msra.mxu0 0.0
      %586 = vmatprep.subr.mxu0 0.0
      %587 = vmatpush1.msra.mxu0 0.0
      %588 = vmatprep.subr.mxu0 0.0
      %589 = vmatpush1.msra.mxu0 0.0
      %590 = vmatprep.subr.mxu0 0.0
      %591 = vmatpush1.msra.mxu0 %v156
      %592 = vmatprep.subr.mxu0 0.0
      %593 = vmatpush1.msra.mxu0 %v155
      %594 = vmatprep.subr.mxu0 0.0
      %595 = vmatpush1.msra.mxu0 %v154
      %596 = vmatprep.subr.mxu0 0.0
      %597 = vmatpush1.msra.mxu0 %v153
      %598 = vmatprep.subr.mxu0 0.0
      %599 = vmatpush2.msra.mxu0 0.0
      %600 = vmatprep.subr.mxu0 0.0
      %601 = vmatpush2.msra.mxu0 0.0
      %602 = vmatprep.subr.mxu0 0.0
      %603 = vmatpush2.msra.mxu0 0.0
      %604 = vmatprep.subr.mxu0 0.0
      %605 = vmatpush2.msra.mxu0 0.0
      %606 = vmatprep.subr.mxu0 0.0
      %607 = vmatpush2.msra.mxu0 0.0
      %608 = vmatprep.subr.mxu0 0.0
      %609 = vmatpush2.msra.mxu0 0.0
      %610 = vmatprep.subr.mxu0 0.0
      %611 = vmatpush2.msra.mxu0 0.0
      %612 = vmatprep.subr.mxu0 0.0
      %613 = vmatpush2.msra.mxu0 0.0
      %614 = vmatprep.subr.mxu0 0.0
      %615 = vmatpush2.msra.mxu0 0.0
      %616 = vmatprep.subr.mxu0 0.0
      %617 = vmatpush2.msra.mxu0 0.0
      %618 = vmatprep.subr.mxu0 0.0
      %619 = vmatpush2.msra.mxu0 0.0
      %620 = vmatprep.subr.mxu0 0.0
      %621 = vmatpush2.msra.mxu0 0.0
      %622 = vmatprep.subr.mxu0 0.0
      %623 = vmatpush2.msra.mxu0 0.0
      %624 = vmatprep.subr.mxu0 0.0
      %625 = vmatpush2.msra.mxu0 0.0
      %626 = vmatprep.subr.mxu0 0.0
      %627 = vmatpush2.msra.mxu0 0.0
      %628 = vmatprep.subr.mxu0 0.0
      %629 = vmatpush2.msra.mxu0 0.0
      %630 = vmatprep.mubr.f32.mxu0 0.0
      %631 = vmatmul.mubr.f32.gmra.mxu0 %v564
      %v632 = vpop.f32.mrf.mxu0
      %v633 = vadd.f32 %v158, %v632
      %v634 = vpop.f32.mrf.mxu0
      %635 = vdwg.mxu0
      %v636 = vadd.f32 %v563, %v633
      %v637 = vxor.u32 %v636, 2147483648
      %v638 = vmul.f32 %v637, 1.442695
      %v639 = vpow.pop %v638
      %v640 = vadd.f32 %v639, 1.0
      %v641 = vrcp.pop %v640
      %v642 = vmul.f32 1.0, %v641
      %644 = vrot.lane.b32.xlu0 %v633, 64
      %v645 = vpop.permute.xlu0 %644
      %v647 = vmul.f32 %v642, %v645
      %649 = vrot.lane.b32.xlu0 %v647, 64
      %v650 = vpop.permute.xlu0 %649
      %v652 = vadd.f32 %v563, %v650
      %v653 = vtanh.pop %v652
      %v654 = vsub.f32 1.0, %v642
      %656 = vrot.lane.b32.xlu0 %v653, 96
      %v657 = vpop.permute.xlu0 %656
      %v659 = vmul.f32 %v654, %v657
      %v660 = vmul.f32 %v642, %v557
      %v661 = vadd.f32 %v659, %v660
      %663 = vrot.lane.b32.xlu0 %v661, 96
      %v664 = vpop.permute.xlu0 %663
      %666 = vst.msk [vmem:[#allocation3 + $0x3] sm:$0x1] %vm353, %v664
      %v667 = vld [vmem:[#allocation2 + $0x4] sm:$0x1]
      %v668 = vsel %vm249, %v664, 0
      %670 = vmatprep.subr.mxu0 0.0
      %671 = vmatpush1.msra.mxu0 0.0
      %672 = vmatprep.subr.mxu0 0.0
      %673 = vmatpush1.msra.mxu0 0.0
      %674 = vmatprep.subr.mxu0 0.0
      %675 = vmatpush1.msra.mxu0 0.0
      %676 = vmatprep.subr.mxu0 0.0
      %677 = vmatpush1.msra.mxu0 0.0
      %678 = vmatprep.subr.mxu0 0.0
      %679 = vmatpush1.msra.mxu0 0.0
      %680 = vmatprep.subr.mxu0 0.0
      %681 = vmatpush1.msra.mxu0 0.0
      %682 = vmatprep.subr.mxu0 0.0
      %683 = vmatpush1.msra.mxu0 0.0
      %684 = vmatprep.subr.mxu0 0.0
      %685 = vmatpush1.msra.mxu0 0.0
      %686 = vmatprep.subr.mxu0 0.0
      %687 = vmatpush1.msra.mxu0 0.0
      %688 = vmatprep.subr.mxu0 0.0
      %689 = vmatpush1.msra.mxu0 0.0
      %690 = vmatprep.subr.mxu0 0.0
      %691 = vmatpush1.msra.mxu0 0.0
      %692 = vmatprep.subr.mxu0 0.0
      %693 = vmatpush1.msra.mxu0 0.0
      %694 = vmatprep.subr.mxu0 0.0
      %695 = vmatpush1.msra.mxu0 %v156
      %696 = vmatprep.subr.mxu0 0.0
      %697 = vmatpush1.msra.mxu0 %v155
      %698 = vmatprep.subr.mxu0 0.0
      %699 = vmatpush1.msra.mxu0 %v154
      %700 = vmatprep.subr.mxu0 0.0
      %701 = vmatpush1.msra.mxu0 %v153
      %702 = vmatprep.subr.mxu0 0.0
      %703 = vmatpush2.msra.mxu0 0.0
      %704 = vmatprep.subr.mxu0 0.0
      %705 = vmatpush2.msra.mxu0 0.0
      %706 = vmatprep.subr.mxu0 0.0
      %707 = vmatpush2.msra.mxu0 0.0
      %708 = vmatprep.subr.mxu0 0.0
      %709 = vmatpush2.msra.mxu0 0.0
      %710 = vmatprep.subr.mxu0 0.0
      %711 = vmatpush2.msra.mxu0 0.0
      %712 = vmatprep.subr.mxu0 0.0
      %713 = vmatpush2.msra.mxu0 0.0
      %714 = vmatprep.subr.mxu0 0.0
      %715 = vmatpush2.msra.mxu0 0.0
      %716 = vmatprep.subr.mxu0 0.0
      %717 = vmatpush2.msra.mxu0 0.0
      %718 = vmatprep.subr.mxu0 0.0
      %719 = vmatpush2.msra.mxu0 0.0
      %720 = vmatprep.subr.mxu0 0.0
      %721 = vmatpush2.msra.mxu0 0.0
      %722 = vmatprep.subr.mxu0 0.0
      %723 = vmatpush2.msra.mxu0 0.0
      %724 = vmatprep.subr.mxu0 0.0
      %725 = vmatpush2.msra.mxu0 0.0
      %726 = vmatprep.subr.mxu0 0.0
      %727 = vmatpush2.msra.mxu0 0.0
      %728 = vmatprep.subr.mxu0 0.0
      %729 = vmatpush2.msra.mxu0 0.0
      %730 = vmatprep.subr.mxu0 0.0
      %731 = vmatpush2.msra.mxu0 0.0
      %732 = vmatprep.subr.mxu0 0.0
      %733 = vmatpush2.msra.mxu0 0.0
      %734 = vmatprep.mubr.f32.mxu0 0.0
      %735 = vmatmul.mubr.f32.gmra.mxu0 %v668
      %v736 = vpop.f32.mrf.mxu0
      %v737 = vadd.f32 %v158, %v736
      %v738 = vpop.f32.mrf.mxu0
      %739 = vdwg.mxu0
      %v740 = vadd.f32 %v667, %v737
      %v741 = vxor.u32 %v740, 2147483648
      %v742 = vmul.f32 %v741, 1.442695
      %v743 = vpow.pop %v742
      %v744 = vadd.f32 %v743, 1.0
      %v745 = vrcp.pop %v744
      %v746 = vmul.f32 1.0, %v745
      %748 = vrot.lane.b32.xlu0 %v737, 64
      %v749 = vpop.permute.xlu0 %748
      %v751 = vmul.f32 %v746, %v749
      %753 = vrot.lane.b32.xlu0 %v751, 64
      %v754 = vpop.permute.xlu0 %753
      %v756 = vadd.f32 %v667, %v754
      %v757 = vtanh.pop %v756
      %v758 = vsub.f32 1.0, %v746
      %760 = vrot.lane.b32.xlu0 %v757, 96
      %v761 = vpop.permute.xlu0 %760
      %v763 = vmul.f32 %v758, %v761
      %v764 = vmul.f32 %v746, %v661
      %v765 = vadd.f32 %v763, %v764
      %767 = vrot.lane.b32.xlu0 %v765, 96
      %v768 = vpop.permute.xlu0 %767
      %770 = vst.msk [vmem:[#allocation3 + $0x4] sm:$0x1] %vm353, %v768
      %v771 = vld [vmem:[#allocation2 + $0x5] sm:$0x1]
      %v772 = vsel %vm249, %v768, 0
      %774 = vmatprep.subr.mxu0 0.0
      %775 = vmatpush1.msra.mxu0 0.0
      %776 = vmatprep.subr.mxu0 0.0
      %777 = vmatpush1.msra.mxu0 0.0
      %778 = vmatprep.subr.mxu0 0.0
      %779 = vmatpush1.msra.mxu0 0.0
      %780 = vmatprep.subr.mxu0 0.0
      %781 = vmatpush1.msra.mxu0 0.0
      %782 = vmatprep.subr.mxu0 0.0
      %783 = vmatpush1.msra.mxu0 0.0
      %784 = vmatprep.subr.mxu0 0.0
      %785 = vmatpush1.msra.mxu0 0.0
      %786 = vmatprep.subr.mxu0 0.0
      %787 = vmatpush1.msra.mxu0 0.0
      %788 = vmatprep.subr.mxu0 0.0
      %789 = vmatpush1.msra.mxu0 0.0
      %790 = vmatprep.subr.mxu0 0.0
      %791 = vmatpush1.msra.mxu0 0.0
      %792 = vmatprep.subr.mxu0 0.0
      %793 = vmatpush1.msra.mxu0 0.0
      %794 = vmatprep.subr.mxu0 0.0
      %795 = vmatpush1.msra.mxu0 0.0
      %796 = vmatprep.subr.mxu0 0.0
      %797 = vmatpush1.msra.mxu0 0.0
      %798 = vmatprep.subr.mxu0 0.0
      %799 = vmatpush1.msra.mxu0 %v156
      %800 = vmatprep.subr.mxu0 0.0
      %801 = vmatpush1.msra.mxu0 %v155
      %802 = vmatprep.subr.mxu0 0.0
      %803 = vmatpush1.msra.mxu0 %v154
      %804 = vmatprep.subr.mxu0 0.0
      %805 = vmatpush1.msra.mxu0 %v153
      %806 = vmatprep.subr.mxu0 0.0
      %807 = vmatpush2.msra.mxu0 0.0
      %808 = vmatprep.subr.mxu0 0.0
      %809 = vmatpush2.msra.mxu0 0.0
      %810 = vmatprep.subr.mxu0 0.0
      %811 = vmatpush2.msra.mxu0 0.0
      %812 = vmatprep.subr.mxu0 0.0
      %813 = vmatpush2.msra.mxu0 0.0
      %814 = vmatprep.subr.mxu0 0.0
      %815 = vmatpush2.msra.mxu0 0.0
      %816 = vmatprep.subr.mxu0 0.0
      %817 = vmatpush2.msra.mxu0 0.0
      %818 = vmatprep.subr.mxu0 0.0
      %819 = vmatpush2.msra.mxu0 0.0
      %820 = vmatprep.subr.mxu0 0.0
      %821 = vmatpush2.msra.mxu0 0.0
      %822 = vmatprep.subr.mxu0 0.0
      %823 = vmatpush2.msra.mxu0 0.0
      %824 = vmatprep.subr.mxu0 0.0
      %825 = vmatpush2.msra.mxu0 0.0
      %826 = vmatprep.subr.mxu0 0.0
      %827 = vmatpush2.msra.mxu0 0.0
      %828 = vmatprep.subr.mxu0 0.0
      %829 = vmatpush2.msra.mxu0 0.0
      %830 = vmatprep.subr.mxu0 0.0
      %831 = vmatpush2.msra.mxu0 0.0
      %832 = vmatprep.subr.mxu0 0.0
      %833 = vmatpush2.msra.mxu0 0.0
      %834 = vmatprep.subr.mxu0 0.0
      %835 = vmatpush2.msra.mxu0 0.0
      %836 = vmatprep.subr.mxu0 0.0
      %837 = vmatpush2.msra.mxu0 0.0
      %838 = vmatprep.mubr.f32.mxu0 0.0
      %839 = vmatmul.mubr.f32.gmra.mxu0 %v772
      %v840 = vpop.f32.mrf.mxu0
      %v841 = vadd.f32 %v158, %v840
      %v842 = vpop.f32.mrf.mxu0
      %843 = vdwg.mxu0
      %v844 = vadd.f32 %v771, %v841
      %v845 = vxor.u32 %v844, 2147483648
      %v846 = vmul.f32 %v845, 1.442695
      %v847 = vpow.pop %v846
      %v848 = vadd.f32 %v847, 1.0
      %v849 = vrcp.pop %v848
      %v850 = vmul.f32 1.0, %v849
      %852 = vrot.lane.b32.xlu0 %v841, 64
      %v853 = vpop.permute.xlu0 %852
      %v855 = vmul.f32 %v850, %v853
      %857 = vrot.lane.b32.xlu0 %v855, 64
      %v858 = vpop.permute.xlu0 %857
      %v860 = vadd.f32 %v771, %v858
      %v861 = vtanh.pop %v860
      %v862 = vsub.f32 1.0, %v850
      %864 = vrot.lane.b32.xlu0 %v861, 96
      %v865 = vpop.permute.xlu0 %864
      %v867 = vmul.f32 %v862, %v865
      %v868 = vmul.f32 %v850, %v765
      %v869 = vadd.f32 %v867, %v868
      %871 = vrot.lane.b32.xlu0 %v869, 96
      %v872 = vpop.permute.xlu0 %871
      %874 = vst.msk [vmem:[#allocation3 + $0x5] sm:$0x1] %vm353, %v872
      %v875 = vld [vmem:[#allocation2 + $0x6] sm:$0x1]
      %v876 = vsel %vm249, %v872, 0
      %878 = vmatprep.subr.mxu0 0.0
      %879 = vmatpush1.msra.mxu0 0.0
      %880 = vmatprep.subr.mxu0 0.0
      %881 = vmatpush1.msra.mxu0 0.0
      %882 = vmatprep.subr.mxu0 0.0
      %883 = vmatpush1.msra.mxu0 0.0
      %884 = vmatprep.subr.mxu0 0.0
      %885 = vmatpush1.msra.mxu0 0.0
      %886 = vmatprep.subr.mxu0 0.0
      %887 = vmatpush1.msra.mxu0 0.0
      %888 = vmatprep.subr.mxu0 0.0
      %889 = vmatpush1.msra.mxu0 0.0
      %890 = vmatprep.subr.mxu0 0.0
      %891 = vmatpush1.msra.mxu0 0.0
      %892 = vmatprep.subr.mxu0 0.0
      %893 = vmatpush1.msra.mxu0 0.0
      %894 = vmatprep.subr.mxu0 0.0
      %895 = vmatpush1.msra.mxu0 0.0
      %896 = vmatprep.subr.mxu0 0.0
      %897 = vmatpush1.msra.mxu0 0.0
      %898 = vmatprep.subr.mxu0 0.0
      %899 = vmatpush1.msra.mxu0 0.0
      %900 = vmatprep.subr.mxu0 0.0
      %901 = vmatpush1.msra.mxu0 0.0
      %902 = vmatprep.subr.mxu0 0.0
      %903 = vmatpush1.msra.mxu0 %v156
      %904 = vmatprep.subr.mxu0 0.0
      %905 = vmatpush1.msra.mxu0 %v155
      %906 = vmatprep.subr.mxu0 0.0
      %907 = vmatpush1.msra.mxu0 %v154
      %908 = vmatprep.subr.mxu0 0.0
      %909 = vmatpush1.msra.mxu0 %v153
      %910 = vmatprep.subr.mxu0 0.0
      %911 = vmatpush2.msra.mxu0 0.0
      %912 = vmatprep.subr.mxu0 0.0
      %913 = vmatpush2.msra.mxu0 0.0
      %914 = vmatprep.subr.mxu0 0.0
      %915 = vmatpush2.msra.mxu0 0.0
      %916 = vmatprep.subr.mxu0 0.0
      %917 = vmatpush2.msra.mxu0 0.0
      %918 = vmatprep.subr.mxu0 0.0
      %919 = vmatpush2.msra.mxu0 0.0
      %920 = vmatprep.subr.mxu0 0.0
      %921 = vmatpush2.msra.mxu0 0.0
      %922 = vmatprep.subr.mxu0 0.0
      %923 = vmatpush2.msra.mxu0 0.0
      %924 = vmatprep.subr.mxu0 0.0
      %925 = vmatpush2.msra.mxu0 0.0
      %926 = vmatprep.subr.mxu0 0.0
      %927 = vmatpush2.msra.mxu0 0.0
      %928 = vmatprep.subr.mxu0 0.0
      %929 = vmatpush2.msra.mxu0 0.0
      %930 = vmatprep.subr.mxu0 0.0
      %931 = vmatpush2.msra.mxu0 0.0
      %932 = vmatprep.subr.mxu0 0.0
      %933 = vmatpush2.msra.mxu0 0.0
      %934 = vmatprep.subr.mxu0 0.0
      %935 = vmatpush2.msra.mxu0 0.0
      %936 = vmatprep.subr.mxu0 0.0
      %937 = vmatpush2.msra.mxu0 0.0
      %938 = vmatprep.subr.mxu0 0.0
      %939 = vmatpush2.msra.mxu0 0.0
      %940 = vmatprep.subr.mxu0 0.0
      %941 = vmatpush2.msra.mxu0 0.0
      %942 = vmatprep.mubr.f32.mxu0 0.0
      %943 = vmatmul.mubr.f32.gmra.mxu0 %v876
      %v944 = vpop.f32.mrf.mxu0
      %v945 = vadd.f32 %v158, %v944
      %v946 = vpop.f32.mrf.mxu0
      %947 = vdwg.mxu0
      %v948 = vadd.f32 %v875, %v945
      %v949 = vxor.u32 %v948, 2147483648
      %v950 = vmul.f32 %v949, 1.442695
      %v951 = vpow.pop %v950
      %v952 = vadd.f32 %v951, 1.0
      %v953 = vrcp.pop %v952
      %v954 = vmul.f32 1.0, %v953
      %956 = vrot.lane.b32.xlu0 %v945, 64
      %v957 = vpop.permute.xlu0 %956
      %v959 = vmul.f32 %v954, %v957
      %961 = vrot.lane.b32.xlu0 %v959, 64
      %v962 = vpop.permute.xlu0 %961
      %v964 = vadd.f32 %v875, %v962
      %v965 = vtanh.pop %v964
      %v966 = vsub.f32 1.0, %v954
      %968 = vrot.lane.b32.xlu0 %v965, 96
      %v969 = vpop.permute.xlu0 %968
      %v971 = vmul.f32 %v966, %v969
      %v972 = vmul.f32 %v954, %v869
      %v973 = vadd.f32 %v971, %v972
      %975 = vrot.lane.b32.xlu0 %v973, 96
      %v976 = vpop.permute.xlu0 %975
      %978 = vst.msk [vmem:[#allocation3 + $0x6] sm:$0x1] %vm353, %v976
      %v979 = vld [vmem:[#allocation2 + $0x7] sm:$0x1]
      %v980 = vsel %vm249, %v976, 0
      %982 = vmatprep.subr.mxu0 0.0
      %983 = vmatpush1.msra.mxu0 0.0
      %984 = vmatprep.subr.mxu0 0.0
      %985 = vmatpush1.msra.mxu0 0.0
      %986 = vmatprep.subr.mxu0 0.0
      %987 = vmatpush1.msra.mxu0 0.0
      %988 = vmatprep.subr.mxu0 0.0
      %989 = vmatpush1.msra.mxu0 0.0
      %990 = vmatprep.subr.mxu0 0.0
      %991 = vmatpush1.msra.mxu0 0.0
      %992 = vmatprep.subr.mxu0 0.0
      %993 = vmatpush1.msra.mxu0 0.0
      %994 = vmatprep.subr.mxu0 0.0
      %995 = vmatpush1.msra.mxu0 0.0
      %996 = vmatprep.subr.mxu0 0.0
      %997 = vmatpush1.msra.mxu0 0.0
      %998 = vmatprep.subr.mxu0 0.0
      %999 = vmatpush1.msra.mxu0 0.0
      %1000 = vmatprep.subr.mxu0 0.0
      %1001 = vmatpush1.msra.mxu0 0.0
      %1002 = vmatprep.subr.mxu0 0.0
      %1003 = vmatpush1.msra.mxu0 0.0
      %1004 = vmatprep.subr.mxu0 0.0
      %1005 = vmatpush1.msra.mxu0 0.0
      %1006 = vmatprep.subr.mxu0 0.0
      %1007 = vmatpush1.msra.mxu0 %v156
      %1008 = vmatprep.subr.mxu0 0.0
      %1009 = vmatpush1.msra.mxu0 %v155
      %1010 = vmatprep.subr.mxu0 0.0
      %1011 = vmatpush1.msra.mxu0 %v154
      %1012 = vmatprep.subr.mxu0 0.0
      %1013 = vmatpush1.msra.mxu0 %v153
      %1014 = vmatprep.subr.mxu0 0.0
      %1015 = vmatpush2.msra.mxu0 0.0
      %1016 = vmatprep.subr.mxu0 0.0
      %1017 = vmatpush2.msra.mxu0 0.0
      %1018 = vmatprep.subr.mxu0 0.0
      %1019 = vmatpush2.msra.mxu0 0.0
      %1020 = vmatprep.subr.mxu0 0.0
      %1021 = vmatpush2.msra.mxu0 0.0
      %1022 = vmatprep.subr.mxu0 0.0
      %1023 = vmatpush2.msra.mxu0 0.0
      %1024 = vmatprep.subr.mxu0 0.0
      %1025 = vmatpush2.msra.mxu0 0.0
      %1026 = vmatprep.subr.mxu0 0.0
      %1027 = vmatpush2.msra.mxu0 0.0
      %1028 = vmatprep.subr.mxu0 0.0
      %1029 = vmatpush2.msra.mxu0 0.0
      %1030 = vmatprep.subr.mxu0 0.0
      %1031 = vmatpush2.msra.mxu0 0.0
      %1032 = vmatprep.subr.mxu0 0.0
      %1033 = vmatpush2.msra.mxu0 0.0
      %1034 = vmatprep.subr.mxu0 0.0
      %1035 = vmatpush2.msra.mxu0 0.0
      %1036 = vmatprep.subr.mxu0 0.0
      %1037 = vmatpush2.msra.mxu0 0.0
      %1038 = vmatprep.subr.mxu0 0.0
      %1039 = vmatpush2.msra.mxu0 0.0
      %1040 = vmatprep.subr.mxu0 0.0
      %1041 = vmatpush2.msra.mxu0 0.0
      %1042 = vmatprep.subr.mxu0 0.0
      %1043 = vmatpush2.msra.mxu0 0.0
      %1044 = vmatprep.subr.mxu0 0.0
      %1045 = vmatpush2.msra.mxu0 0.0
      %1046 = vmatprep.mubr.f32.mxu0 0.0
      %1047 = vmatmul.mubr.f32.gmra.mxu0 %v980
      %v1048 = vpop.f32.mrf.mxu0
      %v1049 = vadd.f32 %v158, %v1048
      %v1050 = vpop.f32.mrf.mxu0
      %1051 = vdwg.mxu0
      %v1052 = vadd.f32 %v979, %v1049
      %v1053 = vxor.u32 %v1052, 2147483648
      %v1054 = vmul.f32 %v1053, 1.442695
      %v1055 = vpow.pop %v1054
      %v1056 = vadd.f32 %v1055, 1.0
      %v1057 = vrcp.pop %v1056
      %v1058 = vmul.f32 1.0, %v1057
      %1060 = vrot.lane.b32.xlu0 %v1049, 64
      %v1061 = vpop.permute.xlu0 %1060
      %v1063 = vmul.f32 %v1058, %v1061
      %1065 = vrot.lane.b32.xlu0 %v1063, 64
      %v1066 = vpop.permute.xlu0 %1065
      %v1068 = vadd.f32 %v979, %v1066
      %v1069 = vtanh.pop %v1068
      %v1070 = vsub.f32 1.0, %v1058
      %1072 = vrot.lane.b32.xlu0 %v1069, 96
      %v1073 = vpop.permute.xlu0 %1072
      %v1075 = vmul.f32 %v1070, %v1073
      %v1076 = vmul.f32 %v1058, %v973
      %v1077 = vadd.f32 %v1075, %v1076
      %1079 = vrot.lane.b32.xlu0 %v1077, 96
      %v1080 = vpop.permute.xlu0 %1079
      %1082 = vst.msk [vmem:[#allocation3 + $0x7] sm:$0x1] %vm353, %v1080
      %v1083 = vld [vmem:[#allocation3] sm:$0xff]
      %v1085 = vsel %vm249, %v1083, 0
      %v1088 = vsel %vm249, %v143, 0
      %1090 = vmatprep.subr.mxu0 0.0
      %1091 = vmatpush1.xpose.msra.mxu0 0.0
      %1092 = vmatprep.subr.mxu0 0.0
      %1093 = vmatpush1.xpose.msra.mxu0 0.0
      %1094 = vmatprep.subr.mxu0 0.0
      %1095 = vmatpush1.xpose.msra.mxu0 0.0
      %1096 = vmatprep.subr.mxu0 0.0
      %1097 = vmatpush1.xpose.msra.mxu0 0.0
      %1098 = vmatprep.subr.mxu0 0.0
      %1099 = vmatpush1.xpose.msra.mxu0 0.0
      %1100 = vmatprep.subr.mxu0 0.0
      %1101 = vmatpush1.xpose.msra.mxu0 0.0
      %1102 = vmatprep.subr.mxu0 0.0
      %1103 = vmatpush1.xpose.msra.mxu0 0.0
      %1104 = vmatprep.subr.mxu0 0.0
      %1105 = vmatpush1.xpose.msra.mxu0 0.0
      %1106 = vmatprep.subr.mxu0 0.0
      %1107 = vmatpush1.xpose.msra.mxu0 0.0
      %1108 = vmatprep.subr.mxu0 0.0
      %1109 = vmatpush1.xpose.msra.mxu0 0.0
      %1110 = vmatprep.subr.mxu0 0.0
      %1111 = vmatpush1.xpose.msra.mxu0 0.0
      %1112 = vmatprep.subr.mxu0 0.0
      %1113 = vmatpush1.xpose.msra.mxu0 0.0
      %1114 = vmatprep.subr.mxu0 0.0
      %1115 = vmatpush1.xpose.msra.mxu0 0.0
      %1116 = vmatprep.subr.mxu0 0.0
      %1117 = vmatpush1.xpose.msra.mxu0 0.0
      %1118 = vmatprep.subr.mxu0 0.0
      %1119 = vmatpush1.xpose.msra.mxu0 0.0
      %1120 = vmatprep.subr.mxu0 0.0
      %1121 = vmatpush1.xpose.msra.mxu0 %v1088
      %1122 = vmatprep.subr.mxu0 0.0
      %1123 = vmatpush2.xpose.msra.mxu0 0.0
      %1124 = vmatprep.subr.mxu0 0.0
      %1125 = vmatpush2.xpose.msra.mxu0 0.0
      %1126 = vmatprep.subr.mxu0 0.0
      %1127 = vmatpush2.xpose.msra.mxu0 0.0
      %1128 = vmatprep.subr.mxu0 0.0
      %1129 = vmatpush2.xpose.msra.mxu0 0.0
      %1130 = vmatprep.subr.mxu0 0.0
      %1131 = vmatpush2.xpose.msra.mxu0 0.0
      %1132 = vmatprep.subr.mxu0 0.0
      %1133 = vmatpush2.xpose.msra.mxu0 0.0
      %1134 = vmatprep.subr.mxu0 0.0
      %1135 = vmatpush2.xpose.msra.mxu0 0.0
      %1136 = vmatprep.subr.mxu0 0.0
      %1137 = vmatpush2.xpose.msra.mxu0 0.0
      %1138 = vmatprep.subr.mxu0 0.0
      %1139 = vmatpush2.xpose.msra.mxu0 0.0
      %1140 = vmatprep.subr.mxu0 0.0
      %1141 = vmatpush2.xpose.msra.mxu0 0.0
      %1142 = vmatprep.subr.mxu0 0.0
      %1143 = vmatpush2.xpose.msra.mxu0 0.0
      %1144 = vmatprep.subr.mxu0 0.0
      %1145 = vmatpush2.xpose.msra.mxu0 0.0
      %1146 = vmatprep.subr.mxu0 0.0
      %1147 = vmatpush2.xpose.msra.mxu0 0.0
      %1148 = vmatprep.subr.mxu0 0.0
      %1149 = vmatpush2.xpose.msra.mxu0 0.0
      %1150 = vmatprep.subr.mxu0 0.0
      %1151 = vmatpush2.xpose.msra.mxu0 0.0
      %1152 = vmatprep.subr.mxu0 0.0
      %1153 = vmatpush2.xpose.msra.mxu0 0.0
      %1154 = vmatprep.mubr.f32.mxu0 0.0
      %1155 = vmatmul.mubr.f32.gmra.mxu0 %v1085
      %v1156 = vpop.f32.mrf.mxu0
      %v1157 = vadd.f32 0.0, %v1156
      %v1158 = vpop.f32.mrf.mxu0
      %1159 = vdwg.mxu0
      %v1160 = vlaneseq
      %v1161 = vshrl.u32 %v1160, 7
      %v1162 = vsub.s32 0, %v1161
      %v1163 = vrot.slane %v144, %v1162
      %v1164 = vmul.f32 %v1157, %v1163
      %vm1165 = vcmask 64512
      %v1166 = vsel %vm1165, %v1164, -inf
      %v1167 = vrot.slane %v1166, 4
      %v1168 = vmax.f32 %v1166, %v1167
      %v1169 = vrot.slane %v1168, 2
      %v1170 = vmax.f32 %v1168, %v1169
      %v1171 = vrot.slane %v1170, 1
      %v1172 = vmax.f32 %v1170, %v1171
      %v1173 = vsel %vm1165, %v1172, 0.0
      %1174 = vadd.xlane.f32.xlu0 %v1173
      %v1175 = vpop.xlane.xlu0 %1174
      %v1176 = vsel %vm1165, %v1164, 0.0
      %v1177 = vrot.slane %v1176, 4
      %v1178 = vadd.f32 %v1176, %v1177
      %v1179 = vrot.slane %v1178, 2
      %v1180 = vadd.f32 %v1178, %v1179
      %v1181 = vrot.slane %v1180, 1
      %v1182 = vadd.f32 %v1180, %v1181
      %v1183 = vsel %vm1165, %v1182, 0.0
      %1184 = vadd.xlane.f32.xlu0 %v1183
      %v1185 = vpop.xlane.xlu0 %1184
      %v1186 = vmul.f32 %v1185, 0.015625
      %v1187 = vmul.f32 %v1175, %v163
      %v1188 = vsel %vm249, %v1080, 0
      %1190 = vmatprep.subr.mxu0 0.0
      %1191 = vmatpush1.msra.mxu0 0.0
      %1192 = vmatprep.subr.mxu0 0.0
      %1193 = vmatpush1.msra.mxu0 0.0
      %1194 = vmatprep.subr.mxu0 0.0
      %1195 = vmatpush1.msra.mxu0 0.0
      %1196 = vmatprep.subr.mxu0 0.0
      %1197 = vmatpush1.msra.mxu0 0.0
      %1198 = vmatprep.subr.mxu0 0.0
      %1199 = vmatpush1.msra.mxu0 0.0
      %1200 = vmatprep.subr.mxu0 0.0
      %1201 = vmatpush1.msra.mxu0 0.0
      %1202 = vmatprep.subr.mxu0 0.0
      %1203 = vmatpush1.msra.mxu0 0.0
      %1204 = vmatprep.subr.mxu0 0.0
      %1205 = vmatpush1.msra.mxu0 0.0
      %1206 = vmatprep.subr.mxu0 0.0
      %1207 = vmatpush1.msra.mxu0 0.0
      %1208 = vmatprep.subr.mxu0 0.0
      %1209 = vmatpush1.msra.mxu0 0.0
      %1210 = vmatprep.subr.mxu0 0.0
      %1211 = vmatpush1.msra.mxu0 0.0
      %1212 = vmatprep.subr.mxu0 0.0
      %1213 = vmatpush1.msra.mxu0 0.0
      %1214 = vmatprep.subr.mxu0 0.0
      %1215 = vmatpush1.msra.mxu0 %v162
      %1216 = vmatprep.subr.mxu0 0.0
      %1217 = vmatpush1.msra.mxu0 %v161
      %1218 = vmatprep.subr.mxu0 0.0
      %1219 = vmatpush1.msra.mxu0 %v160
      %1220 = vmatprep.subr.mxu0 0.0
      %1221 = vmatpush1.msra.mxu0 %v159
      %1222 = vmatprep.subr.mxu0 0.0
      %1223 = vmatpush2.msra.mxu0 0.0
      %1224 = vmatprep.subr.mxu0 0.0
      %1225 = vmatpush2.msra.mxu0 0.0
      %1226 = vmatprep.subr.mxu0 0.0
      %1227 = vmatpush2.msra.mxu0 0.0
      %1228 = vmatprep.subr.mxu0 0.0
      %1229 = vmatpush2.msra.mxu0 0.0
      %1230 = vmatprep.subr.mxu0 0.0
      %1231 = vmatpush2.msra.mxu0 0.0
      %1232 = vmatprep.subr.mxu0 0.0
      %1233 = vmatpush2.msra.mxu0 0.0
      %1234 = vmatprep.subr.mxu0 0.0
      %1235 = vmatpush2.msra.mxu0 0.0
      %1236 = vmatprep.subr.mxu0 0.0
      %1237 = vmatpush2.msra.mxu0 0.0
      %1238 = vmatprep.subr.mxu0 0.0
      %1239 = vmatpush2.msra.mxu0 0.0
      %1240 = vmatprep.subr.mxu0 0.0
      %1241 = vmatpush2.msra.mxu0 0.0
      %1242 = vmatprep.subr.mxu0 0.0
      %1243 = vmatpush2.msra.mxu0 0.0
      %1244 = vmatprep.subr.mxu0 0.0
      %1245 = vmatpush2.msra.mxu0 0.0
      %1246 = vmatprep.subr.mxu0 0.0
      %1247 = vmatpush2.msra.mxu0 0.0
      %1248 = vmatprep.subr.mxu0 0.0
      %1249 = vmatpush2.msra.mxu0 0.0
      %1250 = vmatprep.subr.mxu0 0.0
      %1251 = vmatpush2.msra.mxu0 0.0
      %1252 = vmatprep.subr.mxu0 0.0
      %1253 = vmatpush2.msra.mxu0 0.0
      %1254 = vmatprep.mubr.f32.mxu0 0.0
      %1255 = vmatmul.mubr.f32.gmra.mxu0 %v1188
      %v1256 = vpop.f32.mrf.mxu0
      %v1257 = vadd.f32 %v1187, %v1256
      %v1258 = vpop.f32.mrf.mxu0
      %1259 = vdwg.mxu0
      %v1260 = vmul.f32 %v1186, %v164
      %v1261 = vadd.f32 %v1257, %v1260
      %v1262 = vadd.f32 %v1261, %v165
      %v1263 = vmax.f32 %v1262, 0.0
      %v1264 = vmul.f32 %v1263, %v166
      %v1265 = vadd.f32 %v1264, %v167
      %v1266 = vsel %vm353, %v1265, 0.0
      %1267 = vadd.xlane.f32.xlu0 %v1266
      %v1268 = vpop.xlane.xlu0 %1267
      %v1269 = vxor.u32 %v1268, 2147483648
      %v1270 = vmul.f32 %v1269, 1.442695
      %v1271 = vpow.pop %v1270
      %v1272 = vadd.f32 %v1271, 1.0
      %v1273 = vrcp.pop %v1272
      %v1274 = vmul.f32 1.0, %v1273
      %v1275 = vlaneseq
      %v1276 = vshrl.u32 %v1275, 7
      %vm1277 = vcmp.eq.s32.totalorder %v1276, 0
      %v1278 = vlaneseq
      %v1279 = vshrl.u32 %v1278, 7
      %v1280 = vsub.s32 0, %v1279
      %v1281 = vrot.slane %v1274, %v1280
      %v1282 = vsel %vm1277, %v1281, 0.0
      %1284 = vrot.lane.b32.xlu0 %v1164, 8
      %v1285 = vpop.permute.xlu0 %1284
      %v1287 = vsel %vm1165, %v1157, %v1285
      %vm1288 = vcmask 130048
      %v1289 = vsel %vm1288, %v1287, %v1282
      %vm1290 = vcmask 138240
      %v1291 = vsel %vm1290, %v1289, 0.0
      %1292 = vst [vmem:[%s141] sm:$0xff] %v1291
      %p1293 = scmp.lt.s32.totalorder %s13, 3
      %s1294 = scalar_select %p1293, %s13, 3
      %s1295 = smul.addr %s1294, 8
      %s1296 = scalar_lea.vmem %s2, %s1295
      // Predicated region
      $region29: #{interact_encoder_forward.1} parent=27 // pred_check
        %p1297 = pneg %p78
      $region30: #{interact_encoder_forward.1} parent=27 // pred_check_branch
        %1299 = sbr.rel (%p1297) target = $region32
      $region31: #{interact_encoder_forward.1} parent=27 // pred_region
        _
      $region32: #{interact_encoder_forward.1} parent=27 // pred_fallthru
        _
    $region28: #{interact_encoder_forward.1} parent=5 // pred_fallthru
      _
    %p1300 = scmp.le.s32.totalorder 2, %s8
    // Predicated region
    $region33: #{interact_encoder_forward.1} parent=5 // pred_check
      %p1301 = pneg %p1300
    $region34: #{interact_encoder_forward.1} parent=5 // pred_check_branch
      %1303 = sbr.rel (%p1301) target = $region36
    $region35: #{interact_encoder_forward.1} parent=5 // pred_region
      %s1304 = ssub.s32 %s8, 2
      // Predicated region
      $region37: #{interact_encoder_forward.1} parent=35 // pred_check
        %p1305 = pneg %p84
      $region38: #{interact_encoder_forward.1} parent=35 // pred_check_branch
        %1307 = sbr.rel (%p1305) target = $region40
      $region39: #{interact_encoder_forward.1} parent=35 // pred_region
        %p1308 = scmp.lt.s32.totalorder %s14, 3
        %s1309 = scalar_select %p1308, %s14, 3
        %s1310 = smul.addr %s1309, 8
        %s1311 = scalar_lea.vmem %s2, %s1310
      $region40: #{interact_encoder_forward.1} parent=35 // pred_fallthru
        _
    $region36: #{interact_encoder_forward.1} parent=5 // pred_fallthru
      _
  $region6: #{interact_encoder_forward.1} parent=0 // loop_footer
    %s12 = sadd.s32 1, %s8
  $region7: #{interact_encoder_forward.1} parent=0 // loop_footer_branch
    %7 = sbr.rel target = $region3
  $region8: #{interact_encoder_forward.1} parent=0 // loop_exit
    _

</llo_original>
